<compile_context>
chip_gen: v5e
topology: v5e:2x2
jax: 0.10.0
libtpu: 0.0.40
codegen_flags: <defaults>
</compile_context>

<pallas_src>
import jax
import jax.numpy as jnp
from jax.experimental import pallas as pl
from jax.experimental.pallas import tpu as pltpu

EMB_DIM = 100                 # fixed by the PyTorch module
KERNELS = (3, 4, 5)           # conv kernel sizes
C_OUT = 150                   # kernel_number per conv
N_FEAT = C_OUT * len(KERNELS) # 450
OUT_DIM = 100                 # final Linear output
PAD = max(KERNELS)            # shared zero padding; conv k starts at offset PAD - k
LPAD = EMB_DIM + 2 * PAD      # padded embedding-axis length


def _textcnn_kernel(x_ref, w3_ref, b3_ref, w4_ref, b4_ref, w5_ref, b5_ref,
                    wo_ref, bo_ref, out_ref):
    """One batch element per grid step.

    x_ref  : (LPAD, C_in)      zero-padded embeddings, (position, channel) layout
    w{k}   : (k, C_in, C_OUT)  conv taps, pre-transposed so each tap is (C_in, C_OUT)
    b{k}   : (1, C_OUT)
    wo_ref : (N_FEAT, OUT_DIM) final Linear weight, pre-transposed
    bo_ref : (1, OUT_DIM)
    out_ref: (1, OUT_DIM)
    """
    x = x_ref[...]
    y = bo_ref[...].astype(jnp.float32)          # start from the output bias

    conv_refs = ((3, w3_ref, b3_ref), (4, w4_ref, b4_ref), (5, w5_ref, b5_ref))
    row = 0
    for k, w_ref, b_ref in conv_refs:
        l_out = EMB_DIM + k + 1                  # Conv1d output length (padding = k)
        off = PAD - k                            # offset inside the shared padding
        # Conv1d as a sum of k tap matmuls on the MXU: (l_out, C_in) @ (C_in, C_OUT).
        acc = jnp.dot(x[off:off + l_out, :], w_ref[0],
                      preferred_element_type=jnp.float32)
        for j in range(1, k):
            acc = acc + jnp.dot(x[off + j:off + j + l_out, :], w_ref[j],
                                preferred_element_type=jnp.float32)
        acc = jnp.maximum(acc + b_ref[...], 0.0)             # bias + ReLU
        pooled = jnp.max(acc, axis=0, keepdims=True)         # global max pool -> (1, C_OUT)
        # Fused concat + Linear: each conv's pooled features hit their row-slice of W_out.
        y = y + jnp.dot(pooled, wo_ref[row:row + C_OUT, :],
                        preferred_element_type=jnp.float32)
        row += C_OUT

    # TODO(synk): dropout(p=0.1) is inference-mode identity here; a training-mode version
    # would draw a mask with pltpu.prng_seed / pltpu.stateful_bernoulli.
    out_ref[...] = y.astype(out_ref.dtype)


def textcnn_block(ids, emb_table, conv_weights, conv_biases, w_out, b_out):
    """Forward pass of TextCNNBlock (eval mode).

    ids          : (B, MAX_LEN) int32 token ids
    emb_table    : (voc_size, EMB_DIM)
    conv_weights : list of (C_OUT, MAX_LEN, k) for k in (3, 4, 5)   [PyTorch Conv1d layout]
    conv_biases  : list of (C_OUT,)
    w_out        : (OUT_DIM, N_FEAT)                                 [PyTorch Linear layout]
    b_out        : (OUT_DIM,)
    returns      : (B, OUT_DIM)
    """
    B, max_len = ids.shape
    dtype = emb_table.dtype

    # TODO(synk): embedding row-gather is done with XLA (jnp.take); a Pallas version needs
    # scalar-prefetched ids + per-row DMA and is left outside the compute kernel.
    x = jnp.take(emb_table, ids, axis=0)                 # (B, MAX_LEN, EMB_DIM)

    # Shared zero padding along the embedding axis, then (position, channel) layout so the
    # kernel's matmuls need no transposes.
    xpad = jnp.pad(x, ((0, 0), (0, 0), (PAD, PAD)))      # (B, MAX_LEN, LPAD)
    xk = jnp.transpose(xpad, (0, 2, 1))                  # (B, LPAD, MAX_LEN)

    w_t = [jnp.transpose(w, (2, 1, 0)) for w in conv_weights]   # (k, C_in, C_OUT)
    b_t = [b.reshape(1, C_OUT) for b in conv_biases]
    wo_t = jnp.transpose(w_out, (1, 0))                  # (N_FEAT, OUT_DIM)
    bo_t = b_out.reshape(1, OUT_DIM)

    sq = (pl.Squeezed(),)
    in_specs = [
        pl.BlockSpec(sq + (LPAD, max_len), lambda b: (b, 0, 0)),
        pl.BlockSpec((KERNELS[0], max_len, C_OUT), lambda b: (0, 0, 0)),
        pl.BlockSpec((1, C_OUT), lambda b: (0, 0)),
        pl.BlockSpec((KERNELS[1], max_len, C_OUT), lambda b: (0, 0, 0)),
        pl.BlockSpec((1, C_OUT), lambda b: (0, 0)),
        pl.BlockSpec((KERNELS[2], max_len, C_OUT), lambda b: (0, 0, 0)),
        pl.BlockSpec((1, C_OUT), lambda b: (0, 0)),
        pl.BlockSpec((N_FEAT, OUT_DIM), lambda b: (0, 0)),
        pl.BlockSpec((1, OUT_DIM), lambda b: (0, 0)),
    ]
    out_spec = pl.BlockSpec(sq + (1, OUT_DIM), lambda b: (b, 0, 0))

    flops_conv = sum(2 * (EMB_DIM + k + 1) * max_len * C_OUT * k for k in KERNELS)
    flops_lin = 2 * N_FEAT * OUT_DIM
    bytes_in = 4 * (xk.size + sum(int(w.size) for w in w_t)
                    + sum(int(b.size) for b in b_t) + int(wo_t.size) + int(bo_t.size))
    cost = pl.CostEstimate(
        flops=int(B * (flops_conv + flops_lin)),
        transcendentals=0,
        bytes_accessed=int(bytes_in + 4 * B * OUT_DIM),
    )

    out = pl.pallas_call(
        _textcnn_kernel,
        out_shape=jax.ShapeDtypeStruct((B, 1, OUT_DIM), dtype),
        grid_spec=pltpu.PrefetchScalarGridSpec(
            num_scalar_prefetch=0,
            grid=(B,),
            in_specs=in_specs,
            out_specs=out_spec,
        ),
        compiler_params=pltpu.CompilerParams(
            dimension_semantics=("parallel",),
            vmem_limit_bytes=64 * 1024 * 1024,
        ),
        cost_estimate=cost,
    )(xk, w_t[0], b_t[0], w_t[1], b_t[1], w_t[2], b_t[2], wo_t, bo_t)

    return out.reshape(B, OUT_DIM)


def _reference(ids, emb_table, conv_ws, conv_bs, w_out, b_out):
    """Pure-JAX translation of the PyTorch forward (eval mode)."""
    x = jnp.take(emb_table, ids, axis=0)                 # (B, MAX_LEN, EMB_DIM)
    feats = []
    for w, b in zip(conv_ws, conv_bs):                   # w: (C_OUT, C_in, k)
        k = w.shape[-1]
        xp = jnp.pad(x, ((0, 0), (0, 0), (k, k)))
        l_out = EMB_DIM + k + 1
        cols = jnp.stack([xp[:, :, j:j + l_out] for j in range(k)], axis=-1)  # (B,C_in,l_out,k)
        conv = jnp.einsum("bclj,ocj->bol", cols, w) + b[None, :, None]
        conv = jnp.maximum(conv, 0.0)
        feats.append(jnp.max(conv, axis=-1))             # (B, C_OUT)
    feat = jnp.concatenate(feats, axis=1)                # (B, N_FEAT)
    return feat @ w_out.T + b_out[None, :]


if __name__ == "__main__":
    B, MAX_LEN, VOC = 2, 16, 1000
    key = jax.random.PRNGKey(0)
    k_ids, k_emb, k_w, k_b, k_wo, k_bo = jax.random.split(key, 6)

    ids = jax.random.randint(k_ids, (B, MAX_LEN), 0, VOC, dtype=jnp.int32)
    emb_table = jax.random.normal(k_emb, (VOC, EMB_DIM), jnp.float32) * 0.1

    wkeys = jax.random.split(k_w, len(KERNELS))
    bkeys = jax.random.split(k_b, len(KERNELS))
    conv_ws = [jax.random.normal(wk, (C_OUT, MAX_LEN, k), jnp.float32) / float(MAX_LEN * k) ** 0.5
               for wk, k in zip(wkeys, KERNELS)]
    conv_bs = [jax.random.normal(bk, (C_OUT,), jnp.float32) * 0.05 for bk in bkeys]
    w_out = jax.random.normal(k_wo, (OUT_DIM, N_FEAT), jnp.float32) / float(N_FEAT) ** 0.5
    b_out = jax.random.normal(k_bo, (OUT_DIM,), jnp.float32) * 0.05

    y = textcnn_block(ids, emb_table, conv_ws, conv_bs, w_out, b_out)
    jax.block_until_ready(y)

    y_ref = _reference(ids, emb_table, conv_ws, conv_bs, w_out, b_out)
    assert y.shape == (B, OUT_DIM)
    assert jnp.allclose(y, y_ref, atol=2e-3, rtol=2e-3), float(jnp.max(jnp.abs(y - y_ref)))

    print("KERNEL_OK")
</pallas_src>

<mosaic_0001>
module attributes {stable_mosaic.version = 11 : i64} {
  func.func @_textcnn_kernel(%arg0: i32, %arg1: memref<1x110x16xf32, #tpu.memory_space<vmem>>, %arg2: memref<3x16x150xf32, #tpu.memory_space<vmem>>, %arg3: memref<1x150xf32, #tpu.memory_space<vmem>>, %arg4: memref<4x16x150xf32, #tpu.memory_space<vmem>>, %arg5: memref<1x150xf32, #tpu.memory_space<vmem>>, %arg6: memref<5x16x150xf32, #tpu.memory_space<vmem>>, %arg7: memref<1x150xf32, #tpu.memory_space<vmem>>, %arg8: memref<450x100xf32, #tpu.memory_space<vmem>>, %arg9: memref<1x100xf32, #tpu.memory_space<vmem>>, %arg10: memref<1x1x100xf32, #tpu.memory_space<vmem>>) attributes {dimension_semantics = [#tpu.dimension_semantics<parallel>], iteration_bounds = array<i64: 2>, scalar_prefetch = 0 : i64, scratch_operands = 0 : i64, tpu.core_type = #tpu.core_type<tc>, window_params = [{transform_indices = @transform_0, window_bounds = array<i64: 1, 110, 16>}, {pipeline_mode = #tpu.pipeline_mode<synchronous>, transform_indices = @transform_1, window_bounds = array<i64: 3, 16, 150>}, {pipeline_mode = #tpu.pipeline_mode<synchronous>, transform_indices = @transform_2, window_bounds = array<i64: 1, 150>}, {pipeline_mode = #tpu.pipeline_mode<synchronous>, transform_indices = @transform_3, window_bounds = array<i64: 4, 16, 150>}, {pipeline_mode = #tpu.pipeline_mode<synchronous>, transform_indices = @transform_4, window_bounds = array<i64: 1, 150>}, {pipeline_mode = #tpu.pipeline_mode<synchronous>, transform_indices = @transform_5, window_bounds = array<i64: 5, 16, 150>}, {pipeline_mode = #tpu.pipeline_mode<synchronous>, transform_indices = @transform_6, window_bounds = array<i64: 1, 150>}, {pipeline_mode = #tpu.pipeline_mode<synchronous>, transform_indices = @transform_7, window_bounds = array<i64: 450, 100>}, {pipeline_mode = #tpu.pipeline_mode<synchronous>, transform_indices = @transform_8, window_bounds = array<i64: 1, 100>}, {transform_indices = @transform_9, window_bounds = array<i64: 1, 1, 100>}]} {
    %c0 = arith.constant 0 : index
    %c0_0 = arith.constant 0 : index
    %c0_1 = arith.constant 0 : index
    %0 = vector.load %arg1[%c0, %c0_0, %c0_1] : memref<1x110x16xf32, #tpu.memory_space<vmem>>, vector<1x110x16xf32>
    %1 = vector.shape_cast %0 : vector<1x110x16xf32> to vector<110x16xf32>
    %c0_2 = arith.constant 0 : index
    %c0_3 = arith.constant 0 : index
    %2 = vector.load %arg9[%c0_2, %c0_3] : memref<1x100xf32, #tpu.memory_space<vmem>>, vector<1x100xf32>
    %3 = vector.extract_strided_slice %1 {offsets = [2, 0], sizes = [104, 16], strides = [1, 1]} : vector<110x16xf32> to vector<104x16xf32>
    %c0_4 = arith.constant 0 : index
    %c0_5 = arith.constant 0 : index
    %c0_6 = arith.constant 0 : index
    %4 = vector.load %arg2[%c0_4, %c0_5, %c0_6] : memref<3x16x150xf32, #tpu.memory_space<vmem>>, vector<1x16x150xf32>
    %5 = vector.shape_cast %4 : vector<1x16x150xf32> to vector<16x150xf32>
    %cst = arith.constant dense<0.000000e+00> : vector<104x150xf32>
    %6 = tpu.matmul %3, %5, %cst {dimension_numbers = #tpu.dot_dimension_numbers<[1], [0], [0], [1], [0, 0, 1, 1], [], []>} : vector<104x16xf32>, vector<16x150xf32>, vector<104x150xf32> -> vector<104x150xf32>
    %7 = vector.extract_strided_slice %1 {offsets = [3, 0], sizes = [104, 16], strides = [1, 1]} : vector<110x16xf32> to vector<104x16xf32>
    %c1 = arith.constant 1 : index
    %c0_7 = arith.constant 0 : index
    %c0_8 = arith.constant 0 : index
    %8 = vector.load %arg2[%c1, %c0_7, %c0_8] : memref<3x16x150xf32, #tpu.memory_space<vmem>>, vector<1x16x150xf32>
    %9 = vector.shape_cast %8 : vector<1x16x150xf32> to vector<16x150xf32>
    %cst_9 = arith.constant dense<0.000000e+00> : vector<104x150xf32>
    %10 = tpu.matmul %7, %9, %cst_9 {dimension_numbers = #tpu.dot_dimension_numbers<[1], [0], [0], [1], [0, 0, 1, 1], [], []>} : vector<104x16xf32>, vector<16x150xf32>, vector<104x150xf32> -> vector<104x150xf32>
    %11 = arith.addf %6, %10 : vector<104x150xf32>
    %12 = vector.extract_strided_slice %1 {offsets = [4, 0], sizes = [104, 16], strides = [1, 1]} : vector<110x16xf32> to vector<104x16xf32>
    %c2 = arith.constant 2 : index
    %c0_10 = arith.constant 0 : index
    %c0_11 = arith.constant 0 : index
    %13 = vector.load %arg2[%c2, %c0_10, %c0_11] : memref<3x16x150xf32, #tpu.memory_space<vmem>>, vector<1x16x150xf32>
    %14 = vector.shape_cast %13 : vector<1x16x150xf32> to vector<16x150xf32>
    %cst_12 = arith.constant dense<0.000000e+00> : vector<104x150xf32>
    %15 = tpu.matmul %12, %14, %cst_12 {dimension_numbers = #tpu.dot_dimension_numbers<[1], [0], [0], [1], [0, 0, 1, 1], [], []>} : vector<104x16xf32>, vector<16x150xf32>, vector<104x150xf32> -> vector<104x150xf32>
    %16 = arith.addf %11, %15 : vector<104x150xf32>
    %c0_13 = arith.constant 0 : index
    %c0_14 = arith.constant 0 : index
    %17 = vector.load %arg3[%c0_13, %c0_14] : memref<1x150xf32, #tpu.memory_space<vmem>>, vector<1x150xf32>
    %18 = vector.broadcast %17 : vector<1x150xf32> to vector<104x150xf32>
    %19 = arith.addf %16, %18 : vector<104x150xf32>
    %cst_15 = arith.constant 0.000000e+00 : f32
    %20 = vector.broadcast %cst_15 : f32 to vector<104x150xf32>
    %21 = arith.maximumf %19, %20 : vector<104x150xf32>
    %cst_16 = arith.constant dense<0xFF800000> : vector<150xf32>
    %22 = vector.multi_reduction <maximumf>, %21, %cst_16 [0] : vector<104x150xf32> to vector<150xf32>
    %23 = vector.shape_cast %22 : vector<150xf32> to vector<1x150xf32>
    %c0_17 = arith.constant 0 : index
    %c0_18 = arith.constant 0 : index
    %24 = vector.load %arg8[%c0_17, %c0_18] : memref<450x100xf32, #tpu.memory_space<vmem>>, vector<150x100xf32>
    %cst_19 = arith.constant dense<0.000000e+00> : vector<1x100xf32>
    %25 = tpu.matmul %23, %24, %cst_19 {dimension_numbers = #tpu.dot_dimension_numbers<[1], [0], [0], [1], [0, 0, 1, 1], [], []>} : vector<1x150xf32>, vector<150x100xf32>, vector<1x100xf32> -> vector<1x100xf32>
    %26 = arith.addf %2, %25 : vector<1x100xf32>
    %27 = vector.extract_strided_slice %1 {offsets = [1, 0], sizes = [105, 16], strides = [1, 1]} : vector<110x16xf32> to vector<105x16xf32>
    %c0_20 = arith.constant 0 : index
    %c0_21 = arith.constant 0 : index
    %c0_22 = arith.constant 0 : index
    %28 = vector.load %arg4[%c0_20, %c0_21, %c0_22] : memref<4x16x150xf32, #tpu.memory_space<vmem>>, vector<1x16x150xf32>
    %29 = vector.shape_cast %28 : vector<1x16x150xf32> to vector<16x150xf32>
    %cst_23 = arith.constant dense<0.000000e+00> : vector<105x150xf32>
    %30 = tpu.matmul %27, %29, %cst_23 {dimension_numbers = #tpu.dot_dimension_numbers<[1], [0], [0], [1], [0, 0, 1, 1], [], []>} : vector<105x16xf32>, vector<16x150xf32>, vector<105x150xf32> -> vector<105x150xf32>
    %31 = vector.extract_strided_slice %1 {offsets = [2, 0], sizes = [105, 16], strides = [1, 1]} : vector<110x16xf32> to vector<105x16xf32>
    %c1_24 = arith.constant 1 : index
    %c0_25 = arith.constant 0 : index
    %c0_26 = arith.constant 0 : index
    %32 = vector.load %arg4[%c1_24, %c0_25, %c0_26] : memref<4x16x150xf32, #tpu.memory_space<vmem>>, vector<1x16x150xf32>
    %33 = vector.shape_cast %32 : vector<1x16x150xf32> to vector<16x150xf32>
    %cst_27 = arith.constant dense<0.000000e+00> : vector<105x150xf32>
    %34 = tpu.matmul %31, %33, %cst_27 {dimension_numbers = #tpu.dot_dimension_numbers<[1], [0], [0], [1], [0, 0, 1, 1], [], []>} : vector<105x16xf32>, vector<16x150xf32>, vector<105x150xf32> -> vector<105x150xf32>
    %35 = arith.addf %30, %34 : vector<105x150xf32>
    %36 = vector.extract_strided_slice %1 {offsets = [3, 0], sizes = [105, 16], strides = [1, 1]} : vector<110x16xf32> to vector<105x16xf32>
    %c2_28 = arith.constant 2 : index
    %c0_29 = arith.constant 0 : index
    %c0_30 = arith.constant 0 : index
    %37 = vector.load %arg4[%c2_28, %c0_29, %c0_30] : memref<4x16x150xf32, #tpu.memory_space<vmem>>, vector<1x16x150xf32>
    %38 = vector.shape_cast %37 : vector<1x16x150xf32> to vector<16x150xf32>
    %cst_31 = arith.constant dense<0.000000e+00> : vector<105x150xf32>
    %39 = tpu.matmul %36, %38, %cst_31 {dimension_numbers = #tpu.dot_dimension_numbers<[1], [0], [0], [1], [0, 0, 1, 1], [], []>} : vector<105x16xf32>, vector<16x150xf32>, vector<105x150xf32> -> vector<105x150xf32>
    %40 = arith.addf %35, %39 : vector<105x150xf32>
    %41 = vector.extract_strided_slice %1 {offsets = [4, 0], sizes = [105, 16], strides = [1, 1]} : vector<110x16xf32> to vector<105x16xf32>
    %c3 = arith.constant 3 : index
    %c0_32 = arith.constant 0 : index
    %c0_33 = arith.constant 0 : index
    %42 = vector.load %arg4[%c3, %c0_32, %c0_33] : memref<4x16x150xf32, #tpu.memory_space<vmem>>, vector<1x16x150xf32>
    %43 = vector.shape_cast %42 : vector<1x16x150xf32> to vector<16x150xf32>
    %cst_34 = arith.constant dense<0.000000e+00> : vector<105x150xf32>
    %44 = tpu.matmul %41, %43, %cst_34 {dimension_numbers = #tpu.dot_dimension_numbers<[1], [0], [0], [1], [0, 0, 1, 1], [], []>} : vector<105x16xf32>, vector<16x150xf32>, vector<105x150xf32> -> vector<105x150xf32>
    %45 = arith.addf %40, %44 : vector<105x150xf32>
    %c0_35 = arith.constant 0 : index
    %c0_36 = arith.constant 0 : index
    %46 = vector.load %arg5[%c0_35, %c0_36] : memref<1x150xf32, #tpu.memory_space<vmem>>, vector<1x150xf32>
    %47 = vector.broadcast %46 : vector<1x150xf32> to vector<105x150xf32>
    %48 = arith.addf %45, %47 : vector<105x150xf32>
    %cst_37 = arith.constant 0.000000e+00 : f32
    %49 = vector.broadcast %cst_37 : f32 to vector<105x150xf32>
    %50 = arith.maximumf %48, %49 : vector<105x150xf32>
    %cst_38 = arith.constant dense<0xFF800000> : vector<150xf32>
    %51 = vector.multi_reduction <maximumf>, %50, %cst_38 [0] : vector<105x150xf32> to vector<150xf32>
    %52 = vector.shape_cast %51 : vector<150xf32> to vector<1x150xf32>
    %c150 = arith.constant 150 : index
    %c0_39 = arith.constant 0 : index
    %53 = vector.load %arg8[%c150, %c0_39] : memref<450x100xf32, #tpu.memory_space<vmem>>, vector<150x100xf32>
    %cst_40 = arith.constant dense<0.000000e+00> : vector<1x100xf32>
    %54 = tpu.matmul %52, %53, %cst_40 {dimension_numbers = #tpu.dot_dimension_numbers<[1], [0], [0], [1], [0, 0, 1, 1], [], []>} : vector<1x150xf32>, vector<150x100xf32>, vector<1x100xf32> -> vector<1x100xf32>
    %55 = arith.addf %26, %54 : vector<1x100xf32>
    %56 = vector.extract_strided_slice %1 {offsets = [0, 0], sizes = [106, 16], strides = [1, 1]} : vector<110x16xf32> to vector<106x16xf32>
    %c0_41 = arith.constant 0 : index
    %c0_42 = arith.constant 0 : index
    %c0_43 = arith.constant 0 : index
    %57 = vector.load %arg6[%c0_41, %c0_42, %c0_43] : memref<5x16x150xf32, #tpu.memory_space<vmem>>, vector<1x16x150xf32>
    %58 = vector.shape_cast %57 : vector<1x16x150xf32> to vector<16x150xf32>
    %cst_44 = arith.constant dense<0.000000e+00> : vector<106x150xf32>
    %59 = tpu.matmul %56, %58, %cst_44 {dimension_numbers = #tpu.dot_dimension_numbers<[1], [0], [0], [1], [0, 0, 1, 1], [], []>} : vector<106x16xf32>, vector<16x150xf32>, vector<106x150xf32> -> vector<106x150xf32>
    %60 = vector.extract_strided_slice %1 {offsets = [1, 0], sizes = [106, 16], strides = [1, 1]} : vector<110x16xf32> to vector<106x16xf32>
    %c1_45 = arith.constant 1 : index
    %c0_46 = arith.constant 0 : index
    %c0_47 = arith.constant 0 : index
    %61 = vector.load %arg6[%c1_45, %c0_46, %c0_47] : memref<5x16x150xf32, #tpu.memory_space<vmem>>, vector<1x16x150xf32>
    %62 = vector.shape_cast %61 : vector<1x16x150xf32> to vector<16x150xf32>
    %cst_48 = arith.constant dense<0.000000e+00> : vector<106x150xf32>
    %63 = tpu.matmul %60, %62, %cst_48 {dimension_numbers = #tpu.dot_dimension_numbers<[1], [0], [0], [1], [0, 0, 1, 1], [], []>} : vector<106x16xf32>, vector<16x150xf32>, vector<106x150xf32> -> vector<106x150xf32>
    %64 = arith.addf %59, %63 : vector<106x150xf32>
    %65 = vector.extract_strided_slice %1 {offsets = [2, 0], sizes = [106, 16], strides = [1, 1]} : vector<110x16xf32> to vector<106x16xf32>
    %c2_49 = arith.constant 2 : index
    %c0_50 = arith.constant 0 : index
    %c0_51 = arith.constant 0 : index
    %66 = vector.load %arg6[%c2_49, %c0_50, %c0_51] : memref<5x16x150xf32, #tpu.memory_space<vmem>>, vector<1x16x150xf32>
    %67 = vector.shape_cast %66 : vector<1x16x150xf32> to vector<16x150xf32>
    %cst_52 = arith.constant dense<0.000000e+00> : vector<106x150xf32>
    %68 = tpu.matmul %65, %67, %cst_52 {dimension_numbers = #tpu.dot_dimension_numbers<[1], [0], [0], [1], [0, 0, 1, 1], [], []>} : vector<106x16xf32>, vector<16x150xf32>, vector<106x150xf32> -> vector<106x150xf32>
    %69 = arith.addf %64, %68 : vector<106x150xf32>
    %70 = vector.extract_strided_slice %1 {offsets = [3, 0], sizes = [106, 16], strides = [1, 1]} : vector<110x16xf32> to vector<106x16xf32>
    %c3_53 = arith.constant 3 : index
    %c0_54 = arith.constant 0 : index
    %c0_55 = arith.constant 0 : index
    %71 = vector.load %arg6[%c3_53, %c0_54, %c0_55] : memref<5x16x150xf32, #tpu.memory_space<vmem>>, vector<1x16x150xf32>
    %72 = vector.shape_cast %71 : vector<1x16x150xf32> to vector<16x150xf32>
    %cst_56 = arith.constant dense<0.000000e+00> : vector<106x150xf32>
    %73 = tpu.matmul %70, %72, %cst_56 {dimension_numbers = #tpu.dot_dimension_numbers<[1], [0], [0], [1], [0, 0, 1, 1], [], []>} : vector<106x16xf32>, vector<16x150xf32>, vector<106x150xf32> -> vector<106x150xf32>
    %74 = arith.addf %69, %73 : vector<106x150xf32>
    %75 = vector.extract_strided_slice %1 {offsets = [4, 0], sizes = [106, 16], strides = [1, 1]} : vector<110x16xf32> to vector<106x16xf32>
    %c4 = arith.constant 4 : index
    %c0_57 = arith.constant 0 : index
    %c0_58 = arith.constant 0 : index
    %76 = vector.load %arg6[%c4, %c0_57, %c0_58] : memref<5x16x150xf32, #tpu.memory_space<vmem>>, vector<1x16x150xf32>
    %77 = vector.shape_cast %76 : vector<1x16x150xf32> to vector<16x150xf32>
    %cst_59 = arith.constant dense<0.000000e+00> : vector<106x150xf32>
    %78 = tpu.matmul %75, %77, %cst_59 {dimension_numbers = #tpu.dot_dimension_numbers<[1], [0], [0], [1], [0, 0, 1, 1], [], []>} : vector<106x16xf32>, vector<16x150xf32>, vector<106x150xf32> -> vector<106x150xf32>
    %79 = arith.addf %74, %78 : vector<106x150xf32>
    %c0_60 = arith.constant 0 : index
    %c0_61 = arith.constant 0 : index
    %80 = vector.load %arg7[%c0_60, %c0_61] : memref<1x150xf32, #tpu.memory_space<vmem>>, vector<1x150xf32>
    %81 = vector.broadcast %80 : vector<1x150xf32> to vector<106x150xf32>
    %82 = arith.addf %79, %81 : vector<106x150xf32>
    %cst_62 = arith.constant 0.000000e+00 : f32
    %83 = vector.broadcast %cst_62 : f32 to vector<106x150xf32>
    %84 = arith.maximumf %82, %83 : vector<106x150xf32>
    %cst_63 = arith.constant dense<0xFF800000> : vector<150xf32>
    %85 = vector.multi_reduction <maximumf>, %84, %cst_63 [0] : vector<106x150xf32> to vector<150xf32>
    %86 = vector.shape_cast %85 : vector<150xf32> to vector<1x150xf32>
    %c300 = arith.constant 300 : index
    %c0_64 = arith.constant 0 : index
    %87 = vector.load %arg8[%c300, %c0_64] : memref<450x100xf32, #tpu.memory_space<vmem>>, vector<150x100xf32>
    %cst_65 = arith.constant dense<0.000000e+00> : vector<1x100xf32>
    %88 = tpu.matmul %86, %87, %cst_65 {dimension_numbers = #tpu.dot_dimension_numbers<[1], [0], [0], [1], [0, 0, 1, 1], [], []>} : vector<1x150xf32>, vector<150x100xf32>, vector<1x100xf32> -> vector<1x100xf32>
    %89 = arith.addf %55, %88 : vector<1x100xf32>
    %c0_66 = arith.constant 0 : index
    %c0_67 = arith.constant 0 : index
    %c0_68 = arith.constant 0 : index
    %90 = vector.load %arg10[%c0_66, %c0_67, %c0_68] : memref<1x1x100xf32, #tpu.memory_space<vmem>>, vector<1x1x100xf32>
    %91 = vector.shape_cast %90 : vector<1x1x100xf32> to vector<1x100xf32>
    %92 = vector.shape_cast %89 : vector<1x100xf32> to vector<1x1x100xf32>
    tpu.vector_store %arg10[%c0_66, %c0_67, %c0_68], %92 {strides = array<i32>} : memref<1x1x100xf32, #tpu.memory_space<vmem>>, vector<1x1x100xf32>,
    return
  }
  func.func @transform_0(%arg0: i32) -> (i32, i32, i32) {
    %c0_i32 = arith.constant 0 : i32
    %c0_i32_0 = arith.constant 0 : i32
    %c0_i32_1 = arith.constant 0 : i32
    return %arg0, %c0_i32, %c0_i32_0 : i32, i32, i32
  }
  func.func @transform_1(%arg0: i32) -> (i32, i32, i32) {
    %c0_i32 = arith.constant 0 : i32
    %c0_i32_0 = arith.constant 0 : i32
    %c0_i32_1 = arith.constant 0 : i32
    %c0_i32_2 = arith.constant 0 : i32
    return %c0_i32, %c0_i32_0, %c0_i32_1 : i32, i32, i32
  }
  func.func @transform_2(%arg0: i32) -> (i32, i32) {
    %c0_i32 = arith.constant 0 : i32
    %c0_i32_0 = arith.constant 0 : i32
    %c0_i32_1 = arith.constant 0 : i32
    return %c0_i32, %c0_i32_0 : i32, i32
  }
  func.func @transform_3(%arg0: i32) -> (i32, i32, i32) {
    %c0_i32 = arith.constant 0 : i32
    %c0_i32_0 = arith.constant 0 : i32
    %c0_i32_1 = arith.constant 0 : i32
    %c0_i32_2 = arith.constant 0 : i32
    return %c0_i32, %c0_i32_0, %c0_i32_1 : i32, i32, i32
  }
  func.func @transform_4(%arg0: i32) -> (i32, i32) {
    %c0_i32 = arith.constant 0 : i32
    %c0_i32_0 = arith.constant 0 : i32
    %c0_i32_1 = arith.constant 0 : i32
    return %c0_i32, %c0_i32_0 : i32, i32
  }
  func.func @transform_5(%arg0: i32) -> (i32, i32, i32) {
    %c0_i32 = arith.constant 0 : i32
    %c0_i32_0 = arith.constant 0 : i32
    %c0_i32_1 = arith.constant 0 : i32
    %c0_i32_2 = arith.constant 0 : i32
    return %c0_i32, %c0_i32_0, %c0_i32_1 : i32, i32, i32
  }
  func.func @transform_6(%arg0: i32) -> (i32, i32) {
    %c0_i32 = arith.constant 0 : i32
    %c0_i32_0 = arith.constant 0 : i32
    %c0_i32_1 = arith.constant 0 : i32
    return %c0_i32, %c0_i32_0 : i32, i32
  }
  func.func @transform_7(%arg0: i32) -> (i32, i32) {
    %c0_i32 = arith.constant 0 : i32
    %c0_i32_0 = arith.constant 0 : i32
    %c0_i32_1 = arith.constant 0 : i32
    return %c0_i32, %c0_i32_0 : i32, i32
  }
  func.func @transform_8(%arg0: i32) -> (i32, i32) {
    %c0_i32 = arith.constant 0 : i32
    %c0_i32_0 = arith.constant 0 : i32
    %c0_i32_1 = arith.constant 0 : i32
    return %c0_i32, %c0_i32_0 : i32, i32
  }
  func.func @transform_9(%arg0: i32) -> (i32, i32, i32) {
    %c0_i32 = arith.constant 0 : i32
    %c0_i32_0 = arith.constant 0 : i32
    %c0_i32_1 = arith.constant 0 : i32
    return %arg0, %c0_i32, %c0_i32_0 : i32, i32, i32
  }
}

</mosaic_0001>

<llo_original>
// kernel: tpu_custom_call.1
$region0: #{tpu_custom_call.1}
  #allocation0 [shape = 'u32[]', space=smem, size = 0x4, offset = 0x4, fixed_abs, tag = 'smem constant byte address 0x4 - core index']
  #allocation1 [shape = 'u32[72,128]{1,0:T(1,128)}', space=vmem, size = 0x9000, scoped, tag = 'internal scratch']
  %s0 = inlined_call_operand.vmem [shape: f32[2,110,16], index: 0, kind: input, shape index: {}]
  %s1 = inlined_call_operand.vmem [shape: f32[3,16,150], index: 1, kind: input, shape index: {}]
  %s2 = inlined_call_operand.vmem [shape: f32[1,150], index: 2, kind: input, shape index: {}]
  %s3 = inlined_call_operand.vmem [shape: f32[4,16,150], index: 3, kind: input, shape index: {}]
  %s4 = inlined_call_operand.vmem [shape: f32[1,150], index: 4, kind: input, shape index: {}]
  %s5 = inlined_call_operand.vmem [shape: f32[5,16,150], index: 5, kind: input, shape index: {}]
  %s6 = inlined_call_operand.vmem [shape: f32[1,150], index: 6, kind: input, shape index: {}]
  %s7 = inlined_call_operand.vmem [shape: f32[450,100], index: 7, kind: input, shape index: {}]
  %s8 = inlined_call_operand.vmem [shape: f32[1,100], index: 8, kind: input, shape index: {}]
  %s9 = inlined_call_operand.hbm [shape: f32[2,1,100], index: 9, kind: output, shape index: {}]
  %s10 = sld [smem:[#allocation0]]
  $region69: #{tpu_custom_call.1} parent=0
    _
  %s12 = ssub.s32 1, %s10
  %s13 = scalar_select 0, %s12, %s10
  $region1: #{tpu_custom_call.1} parent=0
    #allocation2 [shape = 'u8[1024]{0}', space=vmem, size = 0x400, scoped, tag = 'output window, operand 0']
    #allocation3 [shape = 's32[2]{0}', space=sflag, size = 0x8, scoped, tag = 'scoped memory for tpu_custom_call.1']
    %14 = vsyncpa [#allocation3], 0
    %s15 = scalar_lea.sflag [#allocation3], 1
    %16 = vsyncpa %s15, 0
    loop: start=0, step=1, limit=4
    $region2: #{tpu_custom_call.1} parent=1 // loop_pre_header
      _
    $region3: #{tpu_custom_call.1} parent=1 // loop_header
      %s18 = sphi 0, %s22
      %p19 = scmp.ge.s32.totalorder %s18, 4
      %s28 = sphi 0, %s30
      %s31 = sphi 0, %s28
      %s32 = sphi 0, %s31
      %s48 = sphi 0, %s32
      %s52 = sphi 0, %s52
      %s54 = sphi 0, %s52
      %s55 = sphi 0, %s54
      %s69 = sphi 0, %s55
      %s73 = sphi 0, %s73
      %s75 = sphi 0, %s73
      %s76 = sphi 0, %s75
      %s90 = sphi 0, %s76
      %s94 = sphi 0, %s94
      %s96 = sphi 0, %s94
      %s97 = sphi 0, %s96
      %s111 = sphi 0, %s97
      %s115 = sphi 0, %s115
      %s117 = sphi 0, %s115
      %s118 = sphi 0, %s117
      %s132 = sphi 0, %s118
      %s136 = sphi 0, %s136
      %s138 = sphi 0, %s136
      %s139 = sphi 0, %s138
      %s153 = sphi 0, %s139
      %s157 = sphi 0, %s157
      %s159 = sphi 0, %s157
      %s160 = sphi 0, %s159
      %s174 = sphi 0, %s160
      %s178 = sphi 0, %s178
      %s180 = sphi 0, %s178
      %s181 = sphi 0, %s180
      %s195 = sphi 0, %s181
      %s199 = sphi 0, %s199
      %s201 = sphi 0, %s199
      %s202 = sphi 0, %s201
      %s216 = sphi 0, %s202
      %s222 = sphi 0, %s224
      %s225 = sphi 0, %s222
      %s226 = sphi 0, %s225
      %s242 = sphi 0, %s226
    $region4: #{tpu_custom_call.1} parent=1 // loop_header_branch
      %21 = sbr.rel (%p19) target = $region8
    $region5: #{tpu_custom_call.1} parent=1 // loop_body
      %s23 = ssub.s32 %s18, 1
      %s24 = ssub.s32 %s18, 2
      %s25 = sadd.s32 %s18, 1
      %s26 = ssub.s32 %s18, %s25
      %p27 = scmp.eq.s32.totalorder %s26, 0
      %s29 = sadd.s32 %s28, 1
      %s30 = scalar_select %p27, %s28, %s29
      %p33 = pneg %p27
      %p34 = scmp.eq.s32.totalorder %s18, 1
      %p35 = por %p33, %p34
      %p36 = scmp.ne.s32.totalorder %s28, %s31
      %p37 = scmp.eq.s32.totalorder %s18, 0
      %p38 = por %p36, %p37
      %p39 = scmp.ne.s32.totalorder %s28, %s31
      %p40 = scmp.eq.s32.totalorder %s23, 1
      %p41 = por %p39, %p40
      %p42 = scmp.ne.s32.totalorder %s31, %s32
      %p43 = scmp.eq.s32.totalorder %s23, 0
      %p44 = por %p42, %p43
      %p45 = scmp.ne.s32.totalorder %s31, %s32
      %p46 = scmp.eq.s32.totalorder %s24, 1
      %p47 = por %p45, %p46
      %p49 = scmp.ne.s32.totalorder %s32, %s48
      %p50 = scmp.eq.s32.totalorder %s24, 0
      %p51 = por %p49, %p50
      %s53 = sadd.s32 %s52, 1
      %p56 = scmp.eq.s32.totalorder %s18, 1
      %p57 = scmp.ne.s32.totalorder %s52, %s54
      %p58 = scmp.eq.s32.totalorder %s18, 0
      %p59 = por %p57, %p58
      %p60 = scmp.ne.s32.totalorder %s52, %s54
      %p61 = scmp.eq.s32.totalorder %s23, 1
      %p62 = por %p60, %p61
      %p63 = scmp.ne.s32.totalorder %s54, %s55
      %p64 = scmp.eq.s32.totalorder %s23, 0
      %p65 = por %p63, %p64
      %p66 = scmp.ne.s32.totalorder %s54, %s55
      %p67 = scmp.eq.s32.totalorder %s24, 1
      %p68 = por %p66, %p67
      %p70 = scmp.ne.s32.totalorder %s55, %s69
      %p71 = scmp.eq.s32.totalorder %s24, 0
      %p72 = por %p70, %p71
      %s74 = sadd.s32 %s73, 1
      %p77 = scmp.eq.s32.totalorder %s18, 1
      %p78 = scmp.ne.s32.totalorder %s73, %s75
      %p79 = scmp.eq.s32.totalorder %s18, 0
      %p80 = por %p78, %p79
      %p81 = scmp.ne.s32.totalorder %s73, %s75
      %p82 = scmp.eq.s32.totalorder %s23, 1
      %p83 = por %p81, %p82
      %p84 = scmp.ne.s32.totalorder %s75, %s76
      %p85 = scmp.eq.s32.totalorder %s23, 0
      %p86 = por %p84, %p85
      %p87 = scmp.ne.s32.totalorder %s75, %s76
      %p88 = scmp.eq.s32.totalorder %s24, 1
      %p89 = por %p87, %p88
      %p91 = scmp.ne.s32.totalorder %s76, %s90
      %p92 = scmp.eq.s32.totalorder %s24, 0
      %p93 = por %p91, %p92
      %s95 = sadd.s32 %s94, 1
      %p98 = scmp.eq.s32.totalorder %s18, 1
      %p99 = scmp.ne.s32.totalorder %s94, %s96
      %p100 = scmp.eq.s32.totalorder %s18, 0
      %p101 = por %p99, %p100
      %p102 = scmp.ne.s32.totalorder %s94, %s96
      %p103 = scmp.eq.s32.totalorder %s23, 1
      %p104 = por %p102, %p103
      %p105 = scmp.ne.s32.totalorder %s96, %s97
      %p106 = scmp.eq.s32.totalorder %s23, 0
      %p107 = por %p105, %p106
      %p108 = scmp.ne.s32.totalorder %s96, %s97
      %p109 = scmp.eq.s32.totalorder %s24, 1
      %p110 = por %p108, %p109
      %p112 = scmp.ne.s32.totalorder %s97, %s111
      %p113 = scmp.eq.s32.totalorder %s24, 0
      %p114 = por %p112, %p113
      %s116 = sadd.s32 %s115, 1
      %p119 = scmp.eq.s32.totalorder %s18, 1
      %p120 = scmp.ne.s32.totalorder %s115, %s117
      %p121 = scmp.eq.s32.totalorder %s18, 0
      %p122 = por %p120, %p121
      %p123 = scmp.ne.s32.totalorder %s115, %s117
      %p124 = scmp.eq.s32.totalorder %s23, 1
      %p125 = por %p123, %p124
      %p126 = scmp.ne.s32.totalorder %s117, %s118
      %p127 = scmp.eq.s32.totalorder %s23, 0
      %p128 = por %p126, %p127
      %p129 = scmp.ne.s32.totalorder %s117, %s118
      %p130 = scmp.eq.s32.totalorder %s24, 1
      %p131 = por %p129, %p130
      %p133 = scmp.ne.s32.totalorder %s118, %s132
      %p134 = scmp.eq.s32.totalorder %s24, 0
      %p135 = por %p133, %p134
      %s137 = sadd.s32 %s136, 1
      %p140 = scmp.eq.s32.totalorder %s18, 1
      %p141 = scmp.ne.s32.totalorder %s136, %s138
      %p142 = scmp.eq.s32.totalorder %s18, 0
      %p143 = por %p141, %p142
      %p144 = scmp.ne.s32.totalorder %s136, %s138
      %p145 = scmp.eq.s32.totalorder %s23, 1
      %p146 = por %p144, %p145
      %p147 = scmp.ne.s32.totalorder %s138, %s139
      %p148 = scmp.eq.s32.totalorder %s23, 0
      %p149 = por %p147, %p148
      %p150 = scmp.ne.s32.totalorder %s138, %s139
      %p151 = scmp.eq.s32.totalorder %s24, 1
      %p152 = por %p150, %p151
      %p154 = scmp.ne.s32.totalorder %s139, %s153
      %p155 = scmp.eq.s32.totalorder %s24, 0
      %p156 = por %p154, %p155
      %s158 = sadd.s32 %s157, 1
      %p161 = scmp.eq.s32.totalorder %s18, 1
      %p162 = scmp.ne.s32.totalorder %s157, %s159
      %p163 = scmp.eq.s32.totalorder %s18, 0
      %p164 = por %p162, %p163
      %p165 = scmp.ne.s32.totalorder %s157, %s159
      %p166 = scmp.eq.s32.totalorder %s23, 1
      %p167 = por %p165, %p166
      %p168 = scmp.ne.s32.totalorder %s159, %s160
      %p169 = scmp.eq.s32.totalorder %s23, 0
      %p170 = por %p168, %p169
      %p171 = scmp.ne.s32.totalorder %s159, %s160
      %p172 = scmp.eq.s32.totalorder %s24, 1
      %p173 = por %p171, %p172
      %p175 = scmp.ne.s32.totalorder %s160, %s174
      %p176 = scmp.eq.s32.totalorder %s24, 0
      %p177 = por %p175, %p176
      %s179 = sadd.s32 %s178, 1
      %p182 = scmp.eq.s32.totalorder %s18, 1
      %p183 = scmp.ne.s32.totalorder %s178, %s180
      %p184 = scmp.eq.s32.totalorder %s18, 0
      %p185 = por %p183, %p184
      %p186 = scmp.ne.s32.totalorder %s178, %s180
      %p187 = scmp.eq.s32.totalorder %s23, 1
      %p188 = por %p186, %p187
      %p189 = scmp.ne.s32.totalorder %s180, %s181
      %p190 = scmp.eq.s32.totalorder %s23, 0
      %p191 = por %p189, %p190
      %p192 = scmp.ne.s32.totalorder %s180, %s181
      %p193 = scmp.eq.s32.totalorder %s24, 1
      %p194 = por %p192, %p193
      %p196 = scmp.ne.s32.totalorder %s181, %s195
      %p197 = scmp.eq.s32.totalorder %s24, 0
      %p198 = por %p196, %p197
      %s200 = sadd.s32 %s199, 1
      %p203 = scmp.eq.s32.totalorder %s18, 1
      %p204 = scmp.ne.s32.totalorder %s199, %s201
      %p205 = scmp.eq.s32.totalorder %s18, 0
      %p206 = por %p204, %p205
      %p207 = scmp.ne.s32.totalorder %s199, %s201
      %p208 = scmp.eq.s32.totalorder %s23, 1
      %p209 = por %p207, %p208
      %p210 = scmp.ne.s32.totalorder %s201, %s202
      %p211 = scmp.eq.s32.totalorder %s23, 0
      %p212 = por %p210, %p211
      %p213 = scmp.ne.s32.totalorder %s201, %s202
      %p214 = scmp.eq.s32.totalorder %s24, 1
      %p215 = por %p213, %p214
      %p217 = scmp.ne.s32.totalorder %s202, %s216
      %p218 = scmp.eq.s32.totalorder %s24, 0
      %p219 = por %p217, %p218
      %s220 = ssub.s32 %s18, %s25
      %p221 = scmp.eq.s32.totalorder %s220, 0
      %s223 = sadd.s32 %s222, 1
      %s224 = scalar_select %p221, %s222, %s223
      %p227 = pneg %p221
      %p228 = scmp.eq.s32.totalorder %s18, 1
      %p229 = por %p227, %p228
      %p230 = scmp.ne.s32.totalorder %s222, %s225
      %p231 = scmp.eq.s32.totalorder %s18, 0
      %p232 = por %p230, %p231
      %p233 = scmp.ne.s32.totalorder %s222, %s225
      %p234 = scmp.eq.s32.totalorder %s23, 1
      %p235 = por %p233, %p234
      %p236 = scmp.ne.s32.totalorder %s225, %s226
      %p237 = scmp.eq.s32.totalorder %s23, 0
      %p238 = por %p236, %p237
      %p239 = scmp.ne.s32.totalorder %s225, %s226
      %p240 = scmp.eq.s32.totalorder %s24, 1
      %p241 = por %p239, %p240
      %p243 = scmp.ne.s32.totalorder %s226, %s242
      %p244 = scmp.eq.s32.totalorder %s24, 0
      %p245 = por %p243, %p244
      %p246 = scmp.le.s32.totalorder 1, %s18
      %p247 = scmp.lt.s32.totalorder %s18, 3
      %p248 = pnand %p246, %p247
      %p249 = pneg %p248
      // Predicated region
      $region9: #{tpu_custom_call.1} parent=5 // pred_check
        _
      $region10: #{tpu_custom_call.1} parent=5 // pred_check_branch
        %251 = sbr.rel (%p248) target = $region12
      $region11: #{tpu_custom_call.1} parent=5 // pred_region
        %s252 = ssub.s32 %s18, 1
        // Predicated region
        $region13: #{tpu_custom_call.1} parent=11 // pred_check
          %p253 = pneg %p65
        $region14: #{tpu_custom_call.1} parent=11 // pred_check_branch
          %255 = sbr.rel (%p253) target = $region16
        $region15: #{tpu_custom_call.1} parent=11 // pred_region
          _
        $region16: #{tpu_custom_call.1} parent=11 // pred_fallthru
          _
        // Predicated region
        $region17: #{tpu_custom_call.1} parent=11 // pred_check
          %p256 = pneg %p86
        $region18: #{tpu_custom_call.1} parent=11 // pred_check_branch
          %258 = sbr.rel (%p256) target = $region20
        $region19: #{tpu_custom_call.1} parent=11 // pred_region
          _
        $region20: #{tpu_custom_call.1} parent=11 // pred_fallthru
          _
        // Predicated region
        $region21: #{tpu_custom_call.1} parent=11 // pred_check
          %p259 = pneg %p107
        $region22: #{tpu_custom_call.1} parent=11 // pred_check_branch
          %261 = sbr.rel (%p259) target = $region24
        $region23: #{tpu_custom_call.1} parent=11 // pred_region
          _
        $region24: #{tpu_custom_call.1} parent=11 // pred_fallthru
          _
        // Predicated region
        $region25: #{tpu_custom_call.1} parent=11 // pred_check
          %p262 = pneg %p128
        $region26: #{tpu_custom_call.1} parent=11 // pred_check_branch
          %264 = sbr.rel (%p262) target = $region28
        $region27: #{tpu_custom_call.1} parent=11 // pred_region
          _
        $region28: #{tpu_custom_call.1} parent=11 // pred_fallthru
          _
        // Predicated region
        $region29: #{tpu_custom_call.1} parent=11 // pred_check
          %p265 = pneg %p149
        $region30: #{tpu_custom_call.1} parent=11 // pred_check_branch
          %267 = sbr.rel (%p265) target = $region32
        $region31: #{tpu_custom_call.1} parent=11 // pred_region
          _
        $region32: #{tpu_custom_call.1} parent=11 // pred_fallthru
          _
        // Predicated region
        $region33: #{tpu_custom_call.1} parent=11 // pred_check
          %p268 = pneg %p170
        $region34: #{tpu_custom_call.1} parent=11 // pred_check_branch
          %270 = sbr.rel (%p268) target = $region36
        $region35: #{tpu_custom_call.1} parent=11 // pred_region
          _
        $region36: #{tpu_custom_call.1} parent=11 // pred_fallthru
          _
        // Predicated region
        $region37: #{tpu_custom_call.1} parent=11 // pred_check
          %p271 = pneg %p191
        $region38: #{tpu_custom_call.1} parent=11 // pred_check_branch
          %273 = sbr.rel (%p271) target = $region40
        $region39: #{tpu_custom_call.1} parent=11 // pred_region
          _
        $region40: #{tpu_custom_call.1} parent=11 // pred_fallthru
          _
        // Predicated region
        $region41: #{tpu_custom_call.1} parent=11 // pred_check
          %p274 = pneg %p212
        $region42: #{tpu_custom_call.1} parent=11 // pred_check_branch
          %276 = sbr.rel (%p274) target = $region44
        $region43: #{tpu_custom_call.1} parent=11 // pred_region
          _
        $region44: #{tpu_custom_call.1} parent=11 // pred_fallthru
          _
      $region12: #{tpu_custom_call.1} parent=5 // pred_fallthru
        _
      %p277 = scmp.lt.s32.totalorder %s18, 2
      // Predicated region
      $region45: #{tpu_custom_call.1} parent=5 // pred_check
        %p278 = pneg %p277
      $region46: #{tpu_custom_call.1} parent=5 // pred_check_branch
        %280 = sbr.rel (%p278) target = $region48
      $region47: #{tpu_custom_call.1} parent=5 // pred_region
        // Predicated region
        $region49: #{tpu_custom_call.1} parent=47 // pred_check
          %p281 = pneg %p38
        $region50: #{tpu_custom_call.1} parent=47 // pred_check_branch
          %283 = sbr.rel (%p281) target = $region52
        $region51: #{tpu_custom_call.1} parent=47 // pred_region
          %p284 = scmp.lt.s32.totalorder %s18, 1
          %s285 = scalar_select %p284, %s18, 1
          %s286 = smul.addr %s285, 14
          %s287 = smul.addr %s286, 8
          %s288 = scalar_lea.vmem %s0, %s287
        $region52: #{tpu_custom_call.1} parent=47 // pred_fallthru
          _
      $region48: #{tpu_custom_call.1} parent=5 // pred_fallthru
        _
      %p289 = scmp.le.s32.totalorder 1, %s18
      %p290 = scmp.lt.s32.totalorder %s18, 3
      %p291 = pnand %p289, %p290
      %p292 = pneg %p291
      // Predicated region
      $region53: #{tpu_custom_call.1} parent=5 // pred_check
        _
      $region54: #{tpu_custom_call.1} parent=5 // pred_check_branch
        %294 = sbr.rel (%p291) target = $region56
      $region55: #{tpu_custom_call.1} parent=5 // pred_region
        %s295 = ssub.s32 %s18, 1
        %p296 = scmp.lt.s32.totalorder %s23, 1
        %s297 = scalar_select %p296, %s23, 1
        %s298 = smul.addr %s297, 14
        %s299 = smul.addr %s298, 8
        %s300 = scalar_lea.vmem %s0, %s299
        %p301 = pneg %p44
        %p302 = pneg %p41
        %p303 = pneg %p65
        %p304 = pneg %p62
        %p305 = pneg %p86
        %p306 = pneg %p83
        %p307 = pneg %p107
        %p308 = pneg %p104
        %p309 = pneg %p128
        %p310 = pneg %p125
        %p311 = pneg %p149
        %p312 = pneg %p146
        %p313 = pneg %p170
        %p314 = pneg %p167
        %p315 = pneg %p191
        %p316 = pneg %p188
        %p317 = pneg %p212
        %p318 = pneg %p209
        %p319 = pneg %p238
        %p320 = pneg %p235
        %s321 = sand.u32 %s225, 1
        %s322 = scalar_lea.sflag [#allocation3], %s321
        %s323 = sand.u32 %s225, 1
        %s324 = scalar_lea.vmem [#allocation2], %s323
        %p325 = scmp.lt.s32.totalorder %s23, 1
        %s326 = scalar_select %p325, %s23, 1
        %s327 = smul.addr %s326, 14
        %s328 = smul.addr %s327, 8
        %s329 = scalar_lea.vmem %s0, %s328
        %v330 = vld [vmem:[%s329] sm:$0xff]
        %v331 = vld [vmem:[%s329 + $0x8] sm:$0xff]
        %v332 = vld [vmem:[%s329 + $0x10] sm:$0xff]
        %v333 = vld [vmem:[%s329 + $0x18] sm:$0xff]
        %v334 = vld [vmem:[%s329 + $0x20] sm:$0xff]
        %v335 = vld [vmem:[%s329 + $0x28] sm:$0xff]
        %v336 = vld [vmem:[%s329 + $0x30] sm:$0xff]
        %v337 = vld [vmem:[%s329 + $0x38] sm:$0xff]
        %v338 = vld [vmem:[%s329 + $0x40] sm:$0xff]
        %v339 = vld [vmem:[%s329 + $0x48] sm:$0xff]
        %v340 = vld [vmem:[%s329 + $0x50] sm:$0xff]
        %v341 = vld [vmem:[%s329 + $0x58] sm:$0xff]
        %v342 = vld [vmem:[%s329 + $0x60] sm:$0xff]
        %v343 = vld [vmem:[%s329 + $0x68] sm:$0x3f]
        %v344 = vld [vmem:[%s8] sm:$0x1]
        %v345 = vld [vmem:[%s1] sm:$0xff]
        %v346 = vld [vmem:[%s1 + $0x8] sm:$0xff]
        %v347 = vld [vmem:[%s1 + $0x10] sm:$0xff]
        %v348 = vld [vmem:[%s1 + $0x18] sm:$0xff]
        %s349 = scalar_lea.vmem %s1, 32
        %v350 = vld [vmem:[%s349] sm:$0xff]
        %v351 = vld [vmem:[%s349 + $0x8] sm:$0xff]
        %v352 = vld [vmem:[%s349 + $0x10] sm:$0xff]
        %v353 = vld [vmem:[%s349 + $0x18] sm:$0xff]
        %vm368 = vcmask 1044480
        %v369 = vrot.slane %v330, 3
        %v370 = vrot.slane %v331, 3
        %v371 = vsel %vm368, %v369, %v370
        %v372 = vrot.slane %v332, 3
        %v373 = vsel %vm368, %v370, %v372
        %v374 = vrot.slane %v333, 3
        %v375 = vsel %vm368, %v372, %v374
        %v376 = vrot.slane %v334, 3
        %v377 = vsel %vm368, %v374, %v376
        %v378 = vrot.slane %v335, 3
        %v379 = vsel %vm368, %v376, %v378
        %v380 = vrot.slane %v336, 3
        %v381 = vsel %vm368, %v378, %v380
        %v382 = vrot.slane %v337, 3
        %v383 = vsel %vm368, %v380, %v382
        %v384 = vrot.slane %v338, 3
        %v385 = vsel %vm368, %v382, %v384
        %v386 = vrot.slane %v339, 3
        %v387 = vsel %vm368, %v384, %v386
        %v388 = vrot.slane %v340, 3
        %v389 = vsel %vm368, %v386, %v388
        %v390 = vrot.slane %v341, 3
        %v391 = vsel %vm368, %v388, %v390
        %v392 = vrot.slane %v342, 3
        %v393 = vsel %vm368, %v390, %v392
        %v394 = vrot.slane %v343, 3
        %v395 = vsel %vm368, %v392, %v394
        %vm396 = vcmask 130048
        %v397 = vsel %vm396, %v371, 0
        %v399 = vsel %vm396, %v373, 0
        %v401 = vsel %vm396, %v375, 0
        %v403 = vsel %vm396, %v377, 0
        %v405 = vsel %vm396, %v379, 0
        %v407 = vsel %vm396, %v381, 0
        %v409 = vsel %vm396, %v383, 0
        %v411 = vsel %vm396, %v385, 0
        %v413 = vsel %vm396, %v387, 0
        %v415 = vsel %vm396, %v389, 0
        %v417 = vsel %vm396, %v391, 0
        %v419 = vsel %vm396, %v393, 0
        %v421 = vsel %vm396, %v395, 0
        %423 = vmatpush.msra.mxu0 0.0
        %424 = vmatpush.msra.mxu0 0.0
        %425 = vmatpush.msra.mxu0 0.0
        %426 = vmatpush.msra.mxu0 0.0
        %427 = vmatpush.msra.mxu0 0.0
        %428 = vmatpush.msra.mxu0 0.0
        %429 = vmatpush.msra.mxu0 0.0
        %430 = vmatpush.msra.mxu0 0.0
        %431 = vmatpush.msra.mxu0 0.0
        %432 = vmatpush.msra.mxu0 0.0
        %433 = vmatpush.msra.mxu0 0.0
        %434 = vmatpush.msra.mxu0 0.0
        %435 = vmatpush.msra.mxu0 0.0
        %436 = vmatpush.msra.mxu0 0.0
        %437 = vmatpush.msra.mxu0 %v352
        %438 = vmatpush.msra.mxu0 %v350
        %439 = vmatmul.f32.gmra.mxu0 %v397
        %v440 = vpop.f32.mrf.mxu0
        %v441 = vadd.f32 0.0, %v440
        %442 = vmatmul.f32.gmra.mxu0 %v399
        %v443 = vpop.f32.mrf.mxu0
        %v444 = vadd.f32 0.0, %v443
        %445 = vmatmul.f32.gmra.mxu0 %v401
        %v446 = vpop.f32.mrf.mxu0
        %v447 = vadd.f32 0.0, %v446
        %448 = vmatmul.f32.gmra.mxu0 %v403
        %v449 = vpop.f32.mrf.mxu0
        %v450 = vadd.f32 0.0, %v449
        %451 = vmatmul.f32.gmra.mxu0 %v405
        %v452 = vpop.f32.mrf.mxu0
        %v453 = vadd.f32 0.0, %v452
        %454 = vmatmul.f32.gmra.mxu0 %v407
        %v455 = vpop.f32.mrf.mxu0
        %v456 = vadd.f32 0.0, %v455
        %457 = vmatmul.f32.gmra.mxu0 %v409
        %v458 = vpop.f32.mrf.mxu0
        %v459 = vadd.f32 0.0, %v458
        %460 = vmatmul.f32.gmra.mxu0 %v411
        %v461 = vpop.f32.mrf.mxu0
        %v462 = vadd.f32 0.0, %v461
        %463 = vmatmul.f32.gmra.mxu0 %v413
        %v464 = vpop.f32.mrf.mxu0
        %v465 = vadd.f32 0.0, %v464
        %466 = vmatmul.f32.gmra.mxu0 %v415
        %v467 = vpop.f32.mrf.mxu0
        %v468 = vadd.f32 0.0, %v467
        %469 = vmatmul.f32.gmra.mxu0 %v417
        %v470 = vpop.f32.mrf.mxu0
        %v471 = vadd.f32 0.0, %v470
        %472 = vmatmul.f32.gmra.mxu0 %v419
        %v473 = vpop.f32.mrf.mxu0
        %v474 = vadd.f32 0.0, %v473
        %475 = vmatmul.f32.gmra.mxu0 %v421
        %v476 = vpop.f32.mrf.mxu0
        %v477 = vadd.f32 0.0, %v476
        %478 = vdwg.mxu0
        %479 = vmatpush.msra.mxu0 0.0
        %480 = vmatpush.msra.mxu0 0.0
        %481 = vmatpush.msra.mxu0 0.0
        %482 = vmatpush.msra.mxu0 0.0
        %483 = vmatpush.msra.mxu0 0.0
        %484 = vmatpush.msra.mxu0 0.0
        %485 = vmatpush.msra.mxu0 0.0
        %486 = vmatpush.msra.mxu0 0.0
        %487 = vmatpush.msra.mxu0 0.0
        %488 = vmatpush.msra.mxu0 0.0
        %489 = vmatpush.msra.mxu0 0.0
        %490 = vmatpush.msra.mxu0 0.0
        %491 = vmatpush.msra.mxu0 0.0
        %492 = vmatpush.msra.mxu0 0.0
        %493 = vmatpush.msra.mxu0 %v353
        %494 = vmatpush.msra.mxu0 %v351
        %495 = vmatmul.f32.gmra.mxu0 %v397
        %v496 = vpop.f32.mrf.mxu0
        %v497 = vadd.f32 0.0, %v496
        %498 = vmatmul.f32.gmra.mxu0 %v399
        %v499 = vpop.f32.mrf.mxu0
        %v500 = vadd.f32 0.0, %v499
        %501 = vmatmul.f32.gmra.mxu0 %v401
        %v502 = vpop.f32.mrf.mxu0
        %v503 = vadd.f32 0.0, %v502
        %504 = vmatmul.f32.gmra.mxu0 %v403
        %v505 = vpop.f32.mrf.mxu0
        %v506 = vadd.f32 0.0, %v505
        %507 = vmatmul.f32.gmra.mxu0 %v405
        %v508 = vpop.f32.mrf.mxu0
        %v509 = vadd.f32 0.0, %v508
        %510 = vmatmul.f32.gmra.mxu0 %v407
        %v511 = vpop.f32.mrf.mxu0
        %v512 = vadd.f32 0.0, %v511
        %513 = vmatmul.f32.gmra.mxu0 %v409
        %v514 = vpop.f32.mrf.mxu0
        %v515 = vadd.f32 0.0, %v514
        %516 = vmatmul.f32.gmra.mxu0 %v411
        %v517 = vpop.f32.mrf.mxu0
        %v518 = vadd.f32 0.0, %v517
        %519 = vmatmul.f32.gmra.mxu0 %v413
        %v520 = vpop.f32.mrf.mxu0
        %v521 = vadd.f32 0.0, %v520
        %522 = vmatmul.f32.gmra.mxu0 %v415
        %v523 = vpop.f32.mrf.mxu0
        %v524 = vadd.f32 0.0, %v523
        %525 = vmatmul.f32.gmra.mxu0 %v417
        %v526 = vpop.f32.mrf.mxu0
        %v527 = vadd.f32 0.0, %v526
        %528 = vmatmul.f32.gmra.mxu0 %v419
        %v529 = vpop.f32.mrf.mxu0
        %v530 = vadd.f32 0.0, %v529
        %531 = vmatmul.f32.gmra.mxu0 %v421
        %v532 = vpop.f32.mrf.mxu0
        %v533 = vadd.f32 0.0, %v532
        %534 = vdwg.mxu0
        %vm535 = vcmask 1045504
        %v536 = vrot.slane %v330, 2
        %v537 = vrot.slane %v331, 2
        %v538 = vsel %vm535, %v536, %v537
        %v539 = vrot.slane %v332, 2
        %v540 = vsel %vm535, %v537, %v539
        %v541 = vrot.slane %v333, 2
        %v542 = vsel %vm535, %v539, %v541
        %v543 = vrot.slane %v334, 2
        %v544 = vsel %vm535, %v541, %v543
        %v545 = vrot.slane %v335, 2
        %v546 = vsel %vm535, %v543, %v545
        %v547 = vrot.slane %v336, 2
        %v548 = vsel %vm535, %v545, %v547
        %v549 = vrot.slane %v337, 2
        %v550 = vsel %vm535, %v547, %v549
        %v551 = vrot.slane %v338, 2
        %v552 = vsel %vm535, %v549, %v551
        %v553 = vrot.slane %v339, 2
        %v554 = vsel %vm535, %v551, %v553
        %v555 = vrot.slane %v340, 2
        %v556 = vsel %vm535, %v553, %v555
        %v557 = vrot.slane %v341, 2
        %v558 = vsel %vm535, %v555, %v557
        %v559 = vrot.slane %v342, 2
        %v560 = vsel %vm535, %v557, %v559
        %v561 = vrot.slane %v343, 2
        %v562 = vsel %vm535, %v559, %v561
        %v563 = vsel %vm396, %v538, 0
        %v565 = vsel %vm396, %v540, 0
        %v567 = vsel %vm396, %v542, 0
        %v569 = vsel %vm396, %v544, 0
        %v571 = vsel %vm396, %v546, 0
        %v573 = vsel %vm396, %v548, 0
        %v575 = vsel %vm396, %v550, 0
        %v577 = vsel %vm396, %v552, 0
        %v579 = vsel %vm396, %v554, 0
        %v581 = vsel %vm396, %v556, 0
        %v583 = vsel %vm396, %v558, 0
        %v585 = vsel %vm396, %v560, 0
        %v587 = vsel %vm396, %v562, 0
        %589 = vmatpush.msra.mxu0 0.0
        %590 = vmatpush.msra.mxu0 0.0
        %591 = vmatpush.msra.mxu0 0.0
        %592 = vmatpush.msra.mxu0 0.0
        %593 = vmatpush.msra.mxu0 0.0
        %594 = vmatpush.msra.mxu0 0.0
        %595 = vmatpush.msra.mxu0 0.0
        %596 = vmatpush.msra.mxu0 0.0
        %597 = vmatpush.msra.mxu0 0.0
        %598 = vmatpush.msra.mxu0 0.0
        %599 = vmatpush.msra.mxu0 0.0
        %600 = vmatpush.msra.mxu0 0.0
        %601 = vmatpush.msra.mxu0 0.0
        %602 = vmatpush.msra.mxu0 0.0
        %603 = vmatpush.msra.mxu0 %v347
        %604 = vmatpush.msra.mxu0 %v345
        %605 = vmatmul.f32.gmra.mxu0 %v563
        %v606 = vpop.f32.mrf.mxu0
        %v607 = vadd.f32 %v441, %v606
        %608 = vmatmul.f32.gmra.mxu0 %v565
        %v609 = vpop.f32.mrf.mxu0
        %v610 = vadd.f32 %v444, %v609
        %611 = vmatmul.f32.gmra.mxu0 %v567
        %v612 = vpop.f32.mrf.mxu0
        %v613 = vadd.f32 %v447, %v612
        %614 = vmatmul.f32.gmra.mxu0 %v569
        %v615 = vpop.f32.mrf.mxu0
        %v616 = vadd.f32 %v450, %v615
        %617 = vmatmul.f32.gmra.mxu0 %v571
        %v618 = vpop.f32.mrf.mxu0
        %v619 = vadd.f32 %v453, %v618
        %620 = vmatmul.f32.gmra.mxu0 %v573
        %v621 = vpop.f32.mrf.mxu0
        %v622 = vadd.f32 %v456, %v621
        %623 = vmatmul.f32.gmra.mxu0 %v575
        %v624 = vpop.f32.mrf.mxu0
        %v625 = vadd.f32 %v459, %v624
        %626 = vmatmul.f32.gmra.mxu0 %v577
        %v627 = vpop.f32.mrf.mxu0
        %v628 = vadd.f32 %v462, %v627
        %629 = vmatmul.f32.gmra.mxu0 %v579
        %v630 = vpop.f32.mrf.mxu0
        %v631 = vadd.f32 %v465, %v630
        %632 = vmatmul.f32.gmra.mxu0 %v581
        %v633 = vpop.f32.mrf.mxu0
        %v634 = vadd.f32 %v468, %v633
        %635 = vmatmul.f32.gmra.mxu0 %v583
        %v636 = vpop.f32.mrf.mxu0
        %v637 = vadd.f32 %v471, %v636
        %638 = vmatmul.f32.gmra.mxu0 %v585
        %v639 = vpop.f32.mrf.mxu0
        %v640 = vadd.f32 %v474, %v639
        %641 = vmatmul.f32.gmra.mxu0 %v587
        %v642 = vpop.f32.mrf.mxu0
        %v643 = vadd.f32 %v477, %v642
        %644 = vdwg.mxu0
        %645 = vmatpush.msra.mxu0 0.0
        %646 = vmatpush.msra.mxu0 0.0
        %647 = vmatpush.msra.mxu0 0.0
        %648 = vmatpush.msra.mxu0 0.0
        %649 = vmatpush.msra.mxu0 0.0
        %650 = vmatpush.msra.mxu0 0.0
        %651 = vmatpush.msra.mxu0 0.0
        %652 = vmatpush.msra.mxu0 0.0
        %653 = vmatpush.msra.mxu0 0.0
        %654 = vmatpush.msra.mxu0 0.0
        %655 = vmatpush.msra.mxu0 0.0
        %656 = vmatpush.msra.mxu0 0.0
        %657 = vmatpush.msra.mxu0 0.0
        %658 = vmatpush.msra.mxu0 0.0
        %659 = vmatpush.msra.mxu0 %v348
        %660 = vmatpush.msra.mxu0 %v346
        %661 = vmatmul.f32.gmra.mxu0 %v563
        %v662 = vpop.f32.mrf.mxu0
        %v663 = vadd.f32 %v497, %v662
        %664 = vmatmul.f32.gmra.mxu0 %v565
        %v665 = vpop.f32.mrf.mxu0
        %v666 = vadd.f32 %v500, %v665
        %667 = vmatmul.f32.gmra.mxu0 %v567
        %v668 = vpop.f32.mrf.mxu0
        %v669 = vadd.f32 %v503, %v668
        %670 = vmatmul.f32.gmra.mxu0 %v569
        %v671 = vpop.f32.mrf.mxu0
        %v672 = vadd.f32 %v506, %v671
        %673 = vmatmul.f32.gmra.mxu0 %v571
        %v674 = vpop.f32.mrf.mxu0
        %v675 = vadd.f32 %v509, %v674
        %676 = vmatmul.f32.gmra.mxu0 %v573
        %v677 = vpop.f32.mrf.mxu0
        %v678 = vadd.f32 %v512, %v677
        %679 = vmatmul.f32.gmra.mxu0 %v575
        %v680 = vpop.f32.mrf.mxu0
        %v681 = vadd.f32 %v515, %v680
        %682 = vmatmul.f32.gmra.mxu0 %v577
        %v683 = vpop.f32.mrf.mxu0
        %v684 = vadd.f32 %v518, %v683
        %685 = vmatmul.f32.gmra.mxu0 %v579
        %v686 = vpop.f32.mrf.mxu0
        %v687 = vadd.f32 %v521, %v686
        %688 = vmatmul.f32.gmra.mxu0 %v581
        %v689 = vpop.f32.mrf.mxu0
        %v690 = vadd.f32 %v524, %v689
        %691 = vmatmul.f32.gmra.mxu0 %v583
        %v692 = vpop.f32.mrf.mxu0
        %v693 = vadd.f32 %v527, %v692
        %694 = vmatmul.f32.gmra.mxu0 %v585
        %v695 = vpop.f32.mrf.mxu0
        %v696 = vadd.f32 %v530, %v695
        %697 = vmatmul.f32.gmra.mxu0 %v587
        %v698 = vpop.f32.mrf.mxu0
        %v699 = vadd.f32 %v533, %v698
        %700 = vdwg.mxu0
        %s701 = scalar_lea.vmem %s1, 64
        %v702 = vld [vmem:[%s701] sm:$0xff]
        %v703 = vld [vmem:[%s701 + $0x8] sm:$0xff]
        %v704 = vld [vmem:[%s701 + $0x10] sm:$0xff]
        %v705 = vld [vmem:[%s701 + $0x18] sm:$0xff]
        %vm706 = vcmask 1043456
        %v707 = vrot.slane %v330, 4
        %v708 = vrot.slane %v331, 4
        %v709 = vsel %vm706, %v707, %v708
        %v710 = vrot.slane %v332, 4
        %v711 = vsel %vm706, %v708, %v710
        %v712 = vrot.slane %v333, 4
        %v713 = vsel %vm706, %v710, %v712
        %v714 = vrot.slane %v334, 4
        %v715 = vsel %vm706, %v712, %v714
        %v716 = vrot.slane %v335, 4
        %v717 = vsel %vm706, %v714, %v716
        %v718 = vrot.slane %v336, 4
        %v719 = vsel %vm706, %v716, %v718
        %v720 = vrot.slane %v337, 4
        %v721 = vsel %vm706, %v718, %v720
        %v722 = vrot.slane %v338, 4
        %v723 = vsel %vm706, %v720, %v722
        %v724 = vrot.slane %v339, 4
        %v725 = vsel %vm706, %v722, %v724
        %v726 = vrot.slane %v340, 4
        %v727 = vsel %vm706, %v724, %v726
        %v728 = vrot.slane %v341, 4
        %v729 = vsel %vm706, %v726, %v728
        %v730 = vrot.slane %v342, 4
        %v731 = vsel %vm706, %v728, %v730
        %v732 = vrot.slane %v343, 4
        %v733 = vsel %vm706, %v730, %v732
        %v734 = vsel %vm396, %v709, 0
        %v736 = vsel %vm396, %v711, 0
        %v738 = vsel %vm396, %v713, 0
        %v740 = vsel %vm396, %v715, 0
        %v742 = vsel %vm396, %v717, 0
        %v744 = vsel %vm396, %v719, 0
        %v746 = vsel %vm396, %v721, 0
        %v748 = vsel %vm396, %v723, 0
        %v750 = vsel %vm396, %v725, 0
        %v752 = vsel %vm396, %v727, 0
        %v754 = vsel %vm396, %v729, 0
        %v756 = vsel %vm396, %v731, 0
        %v758 = vsel %vm396, %v733, 0
        %760 = vmatpush.msra.mxu0 0.0
        %761 = vmatpush.msra.mxu0 0.0
        %762 = vmatpush.msra.mxu0 0.0
        %763 = vmatpush.msra.mxu0 0.0
        %764 = vmatpush.msra.mxu0 0.0
        %765 = vmatpush.msra.mxu0 0.0
        %766 = vmatpush.msra.mxu0 0.0
        %767 = vmatpush.msra.mxu0 0.0
        %768 = vmatpush.msra.mxu0 0.0
        %769 = vmatpush.msra.mxu0 0.0
        %770 = vmatpush.msra.mxu0 0.0
        %771 = vmatpush.msra.mxu0 0.0
        %772 = vmatpush.msra.mxu0 0.0
        %773 = vmatpush.msra.mxu0 0.0
        %774 = vmatpush.msra.mxu0 %v704
        %775 = vmatpush.msra.mxu0 %v702
        %776 = vmatmul.f32.gmra.mxu0 %v734
        %v777 = vpop.f32.mrf.mxu0
        %v778 = vadd.f32 0.0, %v777
        %779 = vmatmul.f32.gmra.mxu0 %v736
        %v780 = vpop.f32.mrf.mxu0
        %v781 = vadd.f32 0.0, %v780
        %782 = vmatmul.f32.gmra.mxu0 %v738
        %v783 = vpop.f32.mrf.mxu0
        %v784 = vadd.f32 0.0, %v783
        %785 = vmatmul.f32.gmra.mxu0 %v740
        %v786 = vpop.f32.mrf.mxu0
        %v787 = vadd.f32 0.0, %v786
        %788 = vmatmul.f32.gmra.mxu0 %v742
        %v789 = vpop.f32.mrf.mxu0
        %v790 = vadd.f32 0.0, %v789
        %791 = vmatmul.f32.gmra.mxu0 %v744
        %v792 = vpop.f32.mrf.mxu0
        %v793 = vadd.f32 0.0, %v792
        %794 = vmatmul.f32.gmra.mxu0 %v746
        %v795 = vpop.f32.mrf.mxu0
        %v796 = vadd.f32 0.0, %v795
        %797 = vmatmul.f32.gmra.mxu0 %v748
        %v798 = vpop.f32.mrf.mxu0
        %v799 = vadd.f32 0.0, %v798
        %800 = vmatmul.f32.gmra.mxu0 %v750
        %v801 = vpop.f32.mrf.mxu0
        %v802 = vadd.f32 0.0, %v801
        %803 = vmatmul.f32.gmra.mxu0 %v752
        %v804 = vpop.f32.mrf.mxu0
        %v805 = vadd.f32 0.0, %v804
        %806 = vmatmul.f32.gmra.mxu0 %v754
        %v807 = vpop.f32.mrf.mxu0
        %v808 = vadd.f32 0.0, %v807
        %809 = vmatmul.f32.gmra.mxu0 %v756
        %v810 = vpop.f32.mrf.mxu0
        %v811 = vadd.f32 0.0, %v810
        %812 = vmatmul.f32.gmra.mxu0 %v758
        %v813 = vpop.f32.mrf.mxu0
        %v814 = vadd.f32 0.0, %v813
        %815 = vdwg.mxu0
        %816 = vmatpush.msra.mxu0 0.0
        %817 = vmatpush.msra.mxu0 0.0
        %818 = vmatpush.msra.mxu0 0.0
        %819 = vmatpush.msra.mxu0 0.0
        %820 = vmatpush.msra.mxu0 0.0
        %821 = vmatpush.msra.mxu0 0.0
        %822 = vmatpush.msra.mxu0 0.0
        %823 = vmatpush.msra.mxu0 0.0
        %824 = vmatpush.msra.mxu0 0.0
        %825 = vmatpush.msra.mxu0 0.0
        %826 = vmatpush.msra.mxu0 0.0
        %827 = vmatpush.msra.mxu0 0.0
        %828 = vmatpush.msra.mxu0 0.0
        %829 = vmatpush.msra.mxu0 0.0
        %830 = vmatpush.msra.mxu0 %v705
        %831 = vmatpush.msra.mxu0 %v703
        %832 = vmatmul.f32.gmra.mxu0 %v734
        %v833 = vpop.f32.mrf.mxu0
        %v834 = vadd.f32 0.0, %v833
        %835 = vmatmul.f32.gmra.mxu0 %v736
        %v836 = vpop.f32.mrf.mxu0
        %v837 = vadd.f32 0.0, %v836
        %838 = vmatmul.f32.gmra.mxu0 %v738
        %v839 = vpop.f32.mrf.mxu0
        %v840 = vadd.f32 0.0, %v839
        %841 = vmatmul.f32.gmra.mxu0 %v740
        %v842 = vpop.f32.mrf.mxu0
        %v843 = vadd.f32 0.0, %v842
        %844 = vmatmul.f32.gmra.mxu0 %v742
        %v845 = vpop.f32.mrf.mxu0
        %v846 = vadd.f32 0.0, %v845
        %847 = vmatmul.f32.gmra.mxu0 %v744
        %v848 = vpop.f32.mrf.mxu0
        %v849 = vadd.f32 0.0, %v848
        %850 = vmatmul.f32.gmra.mxu0 %v746
        %v851 = vpop.f32.mrf.mxu0
        %v852 = vadd.f32 0.0, %v851
        %853 = vmatmul.f32.gmra.mxu0 %v748
        %v854 = vpop.f32.mrf.mxu0
        %v855 = vadd.f32 0.0, %v854
        %856 = vmatmul.f32.gmra.mxu0 %v750
        %v857 = vpop.f32.mrf.mxu0
        %v858 = vadd.f32 0.0, %v857
        %859 = vmatmul.f32.gmra.mxu0 %v752
        %v860 = vpop.f32.mrf.mxu0
        %v861 = vadd.f32 0.0, %v860
        %862 = vmatmul.f32.gmra.mxu0 %v754
        %v863 = vpop.f32.mrf.mxu0
        %v864 = vadd.f32 0.0, %v863
        %865 = vmatmul.f32.gmra.mxu0 %v756
        %v866 = vpop.f32.mrf.mxu0
        %v867 = vadd.f32 0.0, %v866
        %868 = vmatmul.f32.gmra.mxu0 %v758
        %v869 = vpop.f32.mrf.mxu0
        %v870 = vadd.f32 0.0, %v869
        %871 = vdwg.mxu0
        %v872 = vadd.f32 %v607, %v778
        %v873 = vadd.f32 %v663, %v834
        %v874 = vadd.f32 %v610, %v781
        %v875 = vadd.f32 %v666, %v837
        %v876 = vadd.f32 %v613, %v784
        %v877 = vadd.f32 %v669, %v840
        %v878 = vadd.f32 %v616, %v787
        %v879 = vadd.f32 %v672, %v843
        %v880 = vadd.f32 %v619, %v790
        %v881 = vadd.f32 %v675, %v846
        %v882 = vadd.f32 %v622, %v793
        %v883 = vadd.f32 %v678, %v849
        %v884 = vadd.f32 %v625, %v796
        %v885 = vadd.f32 %v681, %v852
        %v886 = vadd.f32 %v628, %v799
        %v887 = vadd.f32 %v684, %v855
        %v888 = vadd.f32 %v631, %v802
        %v889 = vadd.f32 %v687, %v858
        %v890 = vadd.f32 %v634, %v805
        %v891 = vadd.f32 %v690, %v861
        %v892 = vadd.f32 %v637, %v808
        %v893 = vadd.f32 %v693, %v864
        %v894 = vadd.f32 %v640, %v811
        %v895 = vadd.f32 %v696, %v867
        %v896 = vadd.f32 %v643, %v814
        %v897 = vadd.f32 %v699, %v870
        %v898 = vld [vmem:[%s2] sm:$0x3]
        %v900 = vperm.slane %v898, 0
        %v901 = vperm.slane %v898, 1
        %v904 = vadd.f32 %v872, %v900
        %v905 = vadd.f32 %v873, %v901
        %v906 = vadd.f32 %v874, %v900
        %v907 = vadd.f32 %v875, %v901
        %v908 = vadd.f32 %v876, %v900
        %v909 = vadd.f32 %v877, %v901
        %v910 = vadd.f32 %v878, %v900
        %v911 = vadd.f32 %v879, %v901
        %v912 = vadd.f32 %v880, %v900
        %v913 = vadd.f32 %v881, %v901
        %v914 = vadd.f32 %v882, %v900
        %v915 = vadd.f32 %v883, %v901
        %v916 = vadd.f32 %v884, %v900
        %v917 = vadd.f32 %v885, %v901
        %v918 = vadd.f32 %v886, %v900
        %v919 = vadd.f32 %v887, %v901
        %v920 = vadd.f32 %v888, %v900
        %v921 = vadd.f32 %v889, %v901
        %v922 = vadd.f32 %v890, %v900
        %v923 = vadd.f32 %v891, %v901
        %v924 = vadd.f32 %v892, %v900
        %v925 = vadd.f32 %v893, %v901
        %v926 = vadd.f32 %v894, %v900
        %v927 = vadd.f32 %v895, %v901
        %v928 = vadd.f32 %v896, %v900
        %v929 = vadd.f32 %v897, %v901
        %v930 = vmax.f32 %v904, 0.0
        %v931 = vmax.f32 %v905, 0.0
        %v932 = vmax.f32 %v906, 0.0
        %v933 = vmax.f32 %v907, 0.0
        %v934 = vmax.f32 %v908, 0.0
        %v935 = vmax.f32 %v909, 0.0
        %v936 = vmax.f32 %v910, 0.0
        %v937 = vmax.f32 %v911, 0.0
        %v938 = vmax.f32 %v912, 0.0
        %v939 = vmax.f32 %v913, 0.0
        %v940 = vmax.f32 %v914, 0.0
        %v941 = vmax.f32 %v915, 0.0
        %v942 = vmax.f32 %v916, 0.0
        %v943 = vmax.f32 %v917, 0.0
        %v944 = vmax.f32 %v918, 0.0
        %v945 = vmax.f32 %v919, 0.0
        %v946 = vmax.f32 %v920, 0.0
        %v947 = vmax.f32 %v921, 0.0
        %v948 = vmax.f32 %v922, 0.0
        %v949 = vmax.f32 %v923, 0.0
        %v950 = vmax.f32 %v924, 0.0
        %v951 = vmax.f32 %v925, 0.0
        %v952 = vmax.f32 %v926, 0.0
        %v953 = vmax.f32 %v927, 0.0
        %v954 = vmax.f32 %v928, 0.0
        %v955 = vmax.f32 %v929, 0.0
        %v956 = vmax.f32 %v930, %v934
        %v957 = vmax.f32 %v932, %v936
        %v958 = vmax.f32 %v956, %v938
        %v959 = vmax.f32 %v957, %v940
        %v960 = vmax.f32 %v958, %v942
        %v961 = vmax.f32 %v959, %v944
        %v962 = vmax.f32 %v960, %v946
        %v963 = vmax.f32 %v961, %v948
        %v964 = vmax.f32 %v962, %v950
        %v965 = vmax.f32 %v963, %v952
        %v966 = vmax.f32 %v964, %v954
        %v967 = vmax.f32 %v966, %v965
        %v968 = vrot.slane %v967, 4
        %v969 = vmax.f32 %v967, %v968
        %v970 = vrot.slane %v969, 2
        %v971 = vmax.f32 %v969, %v970
        %v972 = vrot.slane %v971, 1
        %v973 = vmax.f32 %v971, %v972
        %vm974 = vcmask 179200
        %v975 = vsel %vm974, %v931, -inf
        %v976 = vsel %vm974, %v933, -inf
        %v977 = vsel %vm974, %v935, -inf
        %v978 = vmax.f32 %v975, %v977
        %v979 = vsel %vm974, %v937, -inf
        %v980 = vmax.f32 %v976, %v979
        %v981 = vsel %vm974, %v939, -inf
        %v982 = vmax.f32 %v978, %v981
        %v983 = vsel %vm974, %v941, -inf
        %v984 = vmax.f32 %v980, %v983
        %v985 = vsel %vm974, %v943, -inf
        %v986 = vmax.f32 %v982, %v985
        %v987 = vsel %vm974, %v945, -inf
        %v988 = vmax.f32 %v984, %v987
        %v989 = vsel %vm974, %v947, -inf
        %v990 = vmax.f32 %v986, %v989
        %v991 = vsel %vm974, %v949, -inf
        %v992 = vmax.f32 %v988, %v991
        %v993 = vsel %vm974, %v951, -inf
        %v994 = vmax.f32 %v990, %v993
        %v995 = vsel %vm974, %v953, -inf
        %v996 = vmax.f32 %v992, %v995
        %v997 = vsel %vm974, %v955, -inf
        %v998 = vmax.f32 %v994, %v997
        %v999 = vmax.f32 %v998, %v996
        %v1000 = vrot.slane %v999, 4
        %v1001 = vmax.f32 %v999, %v1000
        %v1002 = vrot.slane %v1001, 2
        %v1003 = vmax.f32 %v1001, %v1002
        %v1004 = vrot.slane %v1003, 1
        %v1005 = vmax.f32 %v1003, %v1004
        %v1006 = vld [vmem:[%s7] sm:$0xff]
        %v1007 = vld [vmem:[%s7 + $0x8] sm:$0xff]
        %v1008 = vld [vmem:[%s7 + $0x10] sm:$0xff]
        %v1009 = vld [vmem:[%s7 + $0x18] sm:$0xff]
        %v1010 = vld [vmem:[%s7 + $0x20] sm:$0xff]
        %v1011 = vld [vmem:[%s7 + $0x28] sm:$0xff]
        %v1012 = vld [vmem:[%s7 + $0x30] sm:$0xff]
        %v1013 = vld [vmem:[%s7 + $0x38] sm:$0xff]
        %v1014 = vld [vmem:[%s7 + $0x40] sm:$0xff]
        %v1015 = vld [vmem:[%s7 + $0x48] sm:$0xff]
        %v1016 = vld [vmem:[%s7 + $0x50] sm:$0xff]
        %v1017 = vld [vmem:[%s7 + $0x58] sm:$0xff]
        %v1018 = vld [vmem:[%s7 + $0x60] sm:$0xff]
        %v1019 = vld [vmem:[%s7 + $0x68] sm:$0xff]
        %v1020 = vld [vmem:[%s7 + $0x70] sm:$0xff]
        %v1021 = vld [vmem:[%s7 + $0x78] sm:$0xff]
        %v1022 = vld [vmem:[%s7 + $0x80] sm:$0xff]
        %v1023 = vld [vmem:[%s7 + $0x88] sm:$0xff]
        %v1024 = vld [vmem:[%s7 + $0x90] sm:$0x3f]
        %v1026 = vsel %vm974, %v1005, 0
        %v1029 = vsel %vm535, %v1024, 0
        %1031 = vmatpush.msra.mxu0 %v1021
        %1032 = vmatpush.msra.mxu0 %v1020
        %1033 = vmatpush.msra.mxu0 %v1019
        %1034 = vmatpush.msra.mxu0 %v1018
        %1035 = vmatpush.msra.mxu0 %v1017
        %1036 = vmatpush.msra.mxu0 %v1016
        %1037 = vmatpush.msra.mxu0 %v1015
        %1038 = vmatpush.msra.mxu0 %v1014
        %1039 = vmatpush.msra.mxu0 %v1013
        %1040 = vmatpush.msra.mxu0 %v1012
        %1041 = vmatpush.msra.mxu0 %v1011
        %1042 = vmatpush.msra.mxu0 %v1010
        %1043 = vmatpush.msra.mxu0 %v1009
        %1044 = vmatpush.msra.mxu0 %v1008
        %1045 = vmatpush.msra.mxu0 %v1007
        %1046 = vmatpush.msra.mxu0 %v1006
        %1047 = vmatmul.f32.gmra.mxu0 %v973
        %v1048 = vpop.f32.mrf.mxu0
        %v1049 = vadd.f32 0.0, %v1048
        %1050 = vdwg.mxu0
        %1051 = vmatpush.msra.mxu0 0.0
        %1052 = vmatpush.msra.mxu0 0.0
        %1053 = vmatpush.msra.mxu0 0.0
        %1054 = vmatpush.msra.mxu0 0.0
        %1055 = vmatpush.msra.mxu0 0.0
        %1056 = vmatpush.msra.mxu0 0.0
        %1057 = vmatpush.msra.mxu0 0.0
        %1058 = vmatpush.msra.mxu0 0.0
        %1059 = vmatpush.msra.mxu0 0.0
        %1060 = vmatpush.msra.mxu0 0.0
        %1061 = vmatpush.msra.mxu0 0.0
        %1062 = vmatpush.msra.mxu0 0.0
        %1063 = vmatpush.msra.mxu0 0.0
        %1064 = vmatpush.msra.mxu0 %v1029
        %1065 = vmatpush.msra.mxu0 %v1023
        %1066 = vmatpush.msra.mxu0 %v1022
        %1067 = vmatmul.f32.gmra.mxu0 %v1026
        %v1068 = vpop.f32.mrf.mxu0
        %v1069 = vadd.f32 %v1049, %v1068
        %1070 = vdwg.mxu0
        %v1071 = vadd.f32 %v344, %v1069
        %v1072 = vld [vmem:[%s3] sm:$0xff]
        %v1073 = vld [vmem:[%s3 + $0x8] sm:$0xff]
        %v1074 = vld [vmem:[%s3 + $0x10] sm:$0xff]
        %v1075 = vld [vmem:[%s3 + $0x18] sm:$0xff]
        %s1076 = scalar_lea.vmem %s3, 32
        %v1077 = vld [vmem:[%s1076] sm:$0xff]
        %v1078 = vld [vmem:[%s1076 + $0x8] sm:$0xff]
        %v1079 = vld [vmem:[%s1076 + $0x10] sm:$0xff]
        %v1080 = vld [vmem:[%s1076 + $0x18] sm:$0xff]
        %v1081 = vsel %vm396, %v561, 0
        %1083 = vmatpush.msra.mxu0 0.0
        %1084 = vmatpush.msra.mxu0 0.0
        %1085 = vmatpush.msra.mxu0 0.0
        %1086 = vmatpush.msra.mxu0 0.0
        %1087 = vmatpush.msra.mxu0 0.0
        %1088 = vmatpush.msra.mxu0 0.0
        %1089 = vmatpush.msra.mxu0 0.0
        %1090 = vmatpush.msra.mxu0 0.0
        %1091 = vmatpush.msra.mxu0 0.0
        %1092 = vmatpush.msra.mxu0 0.0
        %1093 = vmatpush.msra.mxu0 0.0
        %1094 = vmatpush.msra.mxu0 0.0
        %1095 = vmatpush.msra.mxu0 0.0
        %1096 = vmatpush.msra.mxu0 0.0
        %1097 = vmatpush.msra.mxu0 %v1079
        %1098 = vmatpush.msra.mxu0 %v1077
        %1099 = vmatmul.f32.gmra.mxu0 %v563
        %v1100 = vpop.f32.mrf.mxu0
        %v1101 = vadd.f32 0.0, %v1100
        %1102 = vmatmul.f32.gmra.mxu0 %v565
        %v1103 = vpop.f32.mrf.mxu0
        %v1104 = vadd.f32 0.0, %v1103
        %1105 = vmatmul.f32.gmra.mxu0 %v567
        %v1106 = vpop.f32.mrf.mxu0
        %v1107 = vadd.f32 0.0, %v1106
        %1108 = vmatmul.f32.gmra.mxu0 %v569
        %v1109 = vpop.f32.mrf.mxu0
        %v1110 = vadd.f32 0.0, %v1109
        %1111 = vmatmul.f32.gmra.mxu0 %v571
        %v1112 = vpop.f32.mrf.mxu0
        %v1113 = vadd.f32 0.0, %v1112
        %1114 = vmatmul.f32.gmra.mxu0 %v573
        %v1115 = vpop.f32.mrf.mxu0
        %v1116 = vadd.f32 0.0, %v1115
        %1117 = vmatmul.f32.gmra.mxu0 %v575
        %v1118 = vpop.f32.mrf.mxu0
        %v1119 = vadd.f32 0.0, %v1118
        %1120 = vmatmul.f32.gmra.mxu0 %v577
        %v1121 = vpop.f32.mrf.mxu0
        %v1122 = vadd.f32 0.0, %v1121
        %1123 = vmatmul.f32.gmra.mxu0 %v579
        %v1124 = vpop.f32.mrf.mxu0
        %v1125 = vadd.f32 0.0, %v1124
        %1126 = vmatmul.f32.gmra.mxu0 %v581
        %v1127 = vpop.f32.mrf.mxu0
        %v1128 = vadd.f32 0.0, %v1127
        %1129 = vmatmul.f32.gmra.mxu0 %v583
        %v1130 = vpop.f32.mrf.mxu0
        %v1131 = vadd.f32 0.0, %v1130
        %1132 = vmatmul.f32.gmra.mxu0 %v585
        %v1133 = vpop.f32.mrf.mxu0
        %v1134 = vadd.f32 0.0, %v1133
        %1135 = vmatmul.f32.gmra.mxu0 %v587
        %v1136 = vpop.f32.mrf.mxu0
        %v1137 = vadd.f32 0.0, %v1136
        %1138 = vmatmul.f32.gmra.mxu0 %v1081
        %v1139 = vpop.f32.mrf.mxu0
        %v1140 = vadd.f32 0.0, %v1139
        %1141 = vdwg.mxu0
        %1142 = vmatpush.msra.mxu0 0.0
        %1143 = vmatpush.msra.mxu0 0.0
        %1144 = vmatpush.msra.mxu0 0.0
        %1145 = vmatpush.msra.mxu0 0.0
        %1146 = vmatpush.msra.mxu0 0.0
        %1147 = vmatpush.msra.mxu0 0.0
        %1148 = vmatpush.msra.mxu0 0.0
        %1149 = vmatpush.msra.mxu0 0.0
        %1150 = vmatpush.msra.mxu0 0.0
        %1151 = vmatpush.msra.mxu0 0.0
        %1152 = vmatpush.msra.mxu0 0.0
        %1153 = vmatpush.msra.mxu0 0.0
        %1154 = vmatpush.msra.mxu0 0.0
        %1155 = vmatpush.msra.mxu0 0.0
        %1156 = vmatpush.msra.mxu0 %v1080
        %1157 = vmatpush.msra.mxu0 %v1078
        %1158 = vmatmul.f32.gmra.mxu0 %v563
        %v1159 = vpop.f32.mrf.mxu0
        %v1160 = vadd.f32 0.0, %v1159
        %1161 = vmatmul.f32.gmra.mxu0 %v565
        %v1162 = vpop.f32.mrf.mxu0
        %v1163 = vadd.f32 0.0, %v1162
        %1164 = vmatmul.f32.gmra.mxu0 %v567
        %v1165 = vpop.f32.mrf.mxu0
        %v1166 = vadd.f32 0.0, %v1165
        %1167 = vmatmul.f32.gmra.mxu0 %v569
        %v1168 = vpop.f32.mrf.mxu0
        %v1169 = vadd.f32 0.0, %v1168
        %1170 = vmatmul.f32.gmra.mxu0 %v571
        %v1171 = vpop.f32.mrf.mxu0
        %v1172 = vadd.f32 0.0, %v1171
        %1173 = vmatmul.f32.gmra.mxu0 %v573
        %v1174 = vpop.f32.mrf.mxu0
        %v1175 = vadd.f32 0.0, %v1174
        %1176 = vmatmul.f32.gmra.mxu0 %v575
        %v1177 = vpop.f32.mrf.mxu0
        %v1178 = vadd.f32 0.0, %v1177
        %1179 = vmatmul.f32.gmra.mxu0 %v577
        %v1180 = vpop.f32.mrf.mxu0
        %v1181 = vadd.f32 0.0, %v1180
        %1182 = vmatmul.f32.gmra.mxu0 %v579
        %v1183 = vpop.f32.mrf.mxu0
        %v1184 = vadd.f32 0.0, %v1183
        %1185 = vmatmul.f32.gmra.mxu0 %v581
        %v1186 = vpop.f32.mrf.mxu0
        %v1187 = vadd.f32 0.0, %v1186
        %1188 = vmatmul.f32.gmra.mxu0 %v583
        %v1189 = vpop.f32.mrf.mxu0
        %v1190 = vadd.f32 0.0, %v1189
        %1191 = vmatmul.f32.gmra.mxu0 %v585
        %v1192 = vpop.f32.mrf.mxu0
        %v1193 = vadd.f32 0.0, %v1192
        %1194 = vmatmul.f32.gmra.mxu0 %v587
        %v1195 = vpop.f32.mrf.mxu0
        %v1196 = vadd.f32 0.0, %v1195
        %1197 = vmatmul.f32.gmra.mxu0 %v1081
        %v1198 = vpop.f32.mrf.mxu0
        %v1199 = vadd.f32 0.0, %v1198
        %1200 = vdwg.mxu0
        %vm1201 = vcmask 1046528
        %v1202 = vrot.slane %v330, 1
        %v1203 = vrot.slane %v331, 1
        %v1204 = vsel %vm1201, %v1202, %v1203
        %v1205 = vrot.slane %v332, 1
        %v1206 = vsel %vm1201, %v1203, %v1205
        %v1207 = vrot.slane %v333, 1
        %v1208 = vsel %vm1201, %v1205, %v1207
        %v1209 = vrot.slane %v334, 1
        %v1210 = vsel %vm1201, %v1207, %v1209
        %v1211 = vrot.slane %v335, 1
        %v1212 = vsel %vm1201, %v1209, %v1211
        %v1213 = vrot.slane %v336, 1
        %v1214 = vsel %vm1201, %v1211, %v1213
        %v1215 = vrot.slane %v337, 1
        %v1216 = vsel %vm1201, %v1213, %v1215
        %v1217 = vrot.slane %v338, 1
        %v1218 = vsel %vm1201, %v1215, %v1217
        %v1219 = vrot.slane %v339, 1
        %v1220 = vsel %vm1201, %v1217, %v1219
        %v1221 = vrot.slane %v340, 1
        %v1222 = vsel %vm1201, %v1219, %v1221
        %v1223 = vrot.slane %v341, 1
        %v1224 = vsel %vm1201, %v1221, %v1223
        %v1225 = vrot.slane %v342, 1
        %v1226 = vsel %vm1201, %v1223, %v1225
        %v1227 = vrot.slane %v343, 1
        %v1228 = vsel %vm1201, %v1225, %v1227
        %v1229 = vsel %vm396, %v1204, 0
        %v1231 = vsel %vm396, %v1206, 0
        %v1233 = vsel %vm396, %v1208, 0
        %v1235 = vsel %vm396, %v1210, 0
        %v1237 = vsel %vm396, %v1212, 0
        %v1239 = vsel %vm396, %v1214, 0
        %v1241 = vsel %vm396, %v1216, 0
        %v1243 = vsel %vm396, %v1218, 0
        %v1245 = vsel %vm396, %v1220, 0
        %v1247 = vsel %vm396, %v1222, 0
        %v1249 = vsel %vm396, %v1224, 0
        %v1251 = vsel %vm396, %v1226, 0
        %v1253 = vsel %vm396, %v1228, 0
        %v1255 = vsel %vm396, %v1227, 0
        %1257 = vmatpush.msra.mxu0 0.0
        %1258 = vmatpush.msra.mxu0 0.0
        %1259 = vmatpush.msra.mxu0 0.0
        %1260 = vmatpush.msra.mxu0 0.0
        %1261 = vmatpush.msra.mxu0 0.0
        %1262 = vmatpush.msra.mxu0 0.0
        %1263 = vmatpush.msra.mxu0 0.0
        %1264 = vmatpush.msra.mxu0 0.0
        %1265 = vmatpush.msra.mxu0 0.0
        %1266 = vmatpush.msra.mxu0 0.0
        %1267 = vmatpush.msra.mxu0 0.0
        %1268 = vmatpush.msra.mxu0 0.0
        %1269 = vmatpush.msra.mxu0 0.0
        %1270 = vmatpush.msra.mxu0 0.0
        %1271 = vmatpush.msra.mxu0 %v1074
        %1272 = vmatpush.msra.mxu0 %v1072
        %1273 = vmatmul.f32.gmra.mxu0 %v1229
        %v1274 = vpop.f32.mrf.mxu0
        %v1275 = vadd.f32 %v1101, %v1274
        %1276 = vmatmul.f32.gmra.mxu0 %v1231
        %v1277 = vpop.f32.mrf.mxu0
        %v1278 = vadd.f32 %v1104, %v1277
        %1279 = vmatmul.f32.gmra.mxu0 %v1233
        %v1280 = vpop.f32.mrf.mxu0
        %v1281 = vadd.f32 %v1107, %v1280
        %1282 = vmatmul.f32.gmra.mxu0 %v1235
        %v1283 = vpop.f32.mrf.mxu0
        %v1284 = vadd.f32 %v1110, %v1283
        %1285 = vmatmul.f32.gmra.mxu0 %v1237
        %v1286 = vpop.f32.mrf.mxu0
        %v1287 = vadd.f32 %v1113, %v1286
        %1288 = vmatmul.f32.gmra.mxu0 %v1239
        %v1289 = vpop.f32.mrf.mxu0
        %v1290 = vadd.f32 %v1116, %v1289
        %1291 = vmatmul.f32.gmra.mxu0 %v1241
        %v1292 = vpop.f32.mrf.mxu0
        %v1293 = vadd.f32 %v1119, %v1292
        %1294 = vmatmul.f32.gmra.mxu0 %v1243
        %v1295 = vpop.f32.mrf.mxu0
        %v1296 = vadd.f32 %v1122, %v1295
        %1297 = vmatmul.f32.gmra.mxu0 %v1245
        %v1298 = vpop.f32.mrf.mxu0
        %v1299 = vadd.f32 %v1125, %v1298
        %1300 = vmatmul.f32.gmra.mxu0 %v1247
        %v1301 = vpop.f32.mrf.mxu0
        %v1302 = vadd.f32 %v1128, %v1301
        %1303 = vmatmul.f32.gmra.mxu0 %v1249
        %v1304 = vpop.f32.mrf.mxu0
        %v1305 = vadd.f32 %v1131, %v1304
        %1306 = vmatmul.f32.gmra.mxu0 %v1251
        %v1307 = vpop.f32.mrf.mxu0
        %v1308 = vadd.f32 %v1134, %v1307
        %1309 = vmatmul.f32.gmra.mxu0 %v1253
        %v1310 = vpop.f32.mrf.mxu0
        %v1311 = vadd.f32 %v1137, %v1310
        %1312 = vmatmul.f32.gmra.mxu0 %v1255
        %v1313 = vpop.f32.mrf.mxu0
        %v1314 = vadd.f32 %v1140, %v1313
        %1315 = vdwg.mxu0
        %1316 = vmatpush.msra.mxu0 0.0
        %1317 = vmatpush.msra.mxu0 0.0
        %1318 = vmatpush.msra.mxu0 0.0
        %1319 = vmatpush.msra.mxu0 0.0
        %1320 = vmatpush.msra.mxu0 0.0
        %1321 = vmatpush.msra.mxu0 0.0
        %1322 = vmatpush.msra.mxu0 0.0
        %1323 = vmatpush.msra.mxu0 0.0
        %1324 = vmatpush.msra.mxu0 0.0
        %1325 = vmatpush.msra.mxu0 0.0
        %1326 = vmatpush.msra.mxu0 0.0
        %1327 = vmatpush.msra.mxu0 0.0
        %1328 = vmatpush.msra.mxu0 0.0
        %1329 = vmatpush.msra.mxu0 0.0
        %1330 = vmatpush.msra.mxu0 %v1075
        %1331 = vmatpush.msra.mxu0 %v1073
        %1332 = vmatmul.f32.gmra.mxu0 %v1229
        %v1333 = vpop.f32.mrf.mxu0
        %v1334 = vadd.f32 %v1160, %v1333
        %1335 = vmatmul.f32.gmra.mxu0 %v1231
        %v1336 = vpop.f32.mrf.mxu0
        %v1337 = vadd.f32 %v1163, %v1336
        %1338 = vmatmul.f32.gmra.mxu0 %v1233
        %v1339 = vpop.f32.mrf.mxu0
        %v1340 = vadd.f32 %v1166, %v1339
        %1341 = vmatmul.f32.gmra.mxu0 %v1235
        %v1342 = vpop.f32.mrf.mxu0
        %v1343 = vadd.f32 %v1169, %v1342
        %1344 = vmatmul.f32.gmra.mxu0 %v1237
        %v1345 = vpop.f32.mrf.mxu0
        %v1346 = vadd.f32 %v1172, %v1345
        %1347 = vmatmul.f32.gmra.mxu0 %v1239
        %v1348 = vpop.f32.mrf.mxu0
        %v1349 = vadd.f32 %v1175, %v1348
        %1350 = vmatmul.f32.gmra.mxu0 %v1241
        %v1351 = vpop.f32.mrf.mxu0
        %v1352 = vadd.f32 %v1178, %v1351
        %1353 = vmatmul.f32.gmra.mxu0 %v1243
        %v1354 = vpop.f32.mrf.mxu0
        %v1355 = vadd.f32 %v1181, %v1354
        %1356 = vmatmul.f32.gmra.mxu0 %v1245
        %v1357 = vpop.f32.mrf.mxu0
        %v1358 = vadd.f32 %v1184, %v1357
        %1359 = vmatmul.f32.gmra.mxu0 %v1247
        %v1360 = vpop.f32.mrf.mxu0
        %v1361 = vadd.f32 %v1187, %v1360
        %1362 = vmatmul.f32.gmra.mxu0 %v1249
        %v1363 = vpop.f32.mrf.mxu0
        %v1364 = vadd.f32 %v1190, %v1363
        %1365 = vmatmul.f32.gmra.mxu0 %v1251
        %v1366 = vpop.f32.mrf.mxu0
        %v1367 = vadd.f32 %v1193, %v1366
        %1368 = vmatmul.f32.gmra.mxu0 %v1253
        %v1369 = vpop.f32.mrf.mxu0
        %v1370 = vadd.f32 %v1196, %v1369
        %1371 = vmatmul.f32.gmra.mxu0 %v1255
        %v1372 = vpop.f32.mrf.mxu0
        %v1373 = vadd.f32 %v1199, %v1372
        %1374 = vdwg.mxu0
        %s1375 = scalar_lea.vmem %s3, 64
        %v1376 = vld [vmem:[%s1375] sm:$0xff]
        %v1377 = vld [vmem:[%s1375 + $0x8] sm:$0xff]
        %v1378 = vld [vmem:[%s1375 + $0x10] sm:$0xff]
        %v1379 = vld [vmem:[%s1375 + $0x18] sm:$0xff]
        %v1380 = vsel %vm396, %v394, 0
        %1382 = vmatpush.msra.mxu0 0.0
        %1383 = vmatpush.msra.mxu0 0.0
        %1384 = vmatpush.msra.mxu0 0.0
        %1385 = vmatpush.msra.mxu0 0.0
        %1386 = vmatpush.msra.mxu0 0.0
        %1387 = vmatpush.msra.mxu0 0.0
        %1388 = vmatpush.msra.mxu0 0.0
        %1389 = vmatpush.msra.mxu0 0.0
        %1390 = vmatpush.msra.mxu0 0.0
        %1391 = vmatpush.msra.mxu0 0.0
        %1392 = vmatpush.msra.mxu0 0.0
        %1393 = vmatpush.msra.mxu0 0.0
        %1394 = vmatpush.msra.mxu0 0.0
        %1395 = vmatpush.msra.mxu0 0.0
        %1396 = vmatpush.msra.mxu0 %v1378
        %1397 = vmatpush.msra.mxu0 %v1376
        %1398 = vmatmul.f32.gmra.mxu0 %v397
        %v1399 = vpop.f32.mrf.mxu0
        %v1400 = vadd.f32 0.0, %v1399
        %1401 = vmatmul.f32.gmra.mxu0 %v399
        %v1402 = vpop.f32.mrf.mxu0
        %v1403 = vadd.f32 0.0, %v1402
        %1404 = vmatmul.f32.gmra.mxu0 %v401
        %v1405 = vpop.f32.mrf.mxu0
        %v1406 = vadd.f32 0.0, %v1405
        %1407 = vmatmul.f32.gmra.mxu0 %v403
        %v1408 = vpop.f32.mrf.mxu0
        %v1409 = vadd.f32 0.0, %v1408
        %1410 = vmatmul.f32.gmra.mxu0 %v405
        %v1411 = vpop.f32.mrf.mxu0
        %v1412 = vadd.f32 0.0, %v1411
        %1413 = vmatmul.f32.gmra.mxu0 %v407
        %v1414 = vpop.f32.mrf.mxu0
        %v1415 = vadd.f32 0.0, %v1414
        %1416 = vmatmul.f32.gmra.mxu0 %v409
        %v1417 = vpop.f32.mrf.mxu0
        %v1418 = vadd.f32 0.0, %v1417
        %1419 = vmatmul.f32.gmra.mxu0 %v411
        %v1420 = vpop.f32.mrf.mxu0
        %v1421 = vadd.f32 0.0, %v1420
        %1422 = vmatmul.f32.gmra.mxu0 %v413
        %v1423 = vpop.f32.mrf.mxu0
        %v1424 = vadd.f32 0.0, %v1423
        %1425 = vmatmul.f32.gmra.mxu0 %v415
        %v1426 = vpop.f32.mrf.mxu0
        %v1427 = vadd.f32 0.0, %v1426
        %1428 = vmatmul.f32.gmra.mxu0 %v417
        %v1429 = vpop.f32.mrf.mxu0
        %v1430 = vadd.f32 0.0, %v1429
        %1431 = vmatmul.f32.gmra.mxu0 %v419
        %v1432 = vpop.f32.mrf.mxu0
        %v1433 = vadd.f32 0.0, %v1432
        %1434 = vmatmul.f32.gmra.mxu0 %v421
        %v1435 = vpop.f32.mrf.mxu0
        %v1436 = vadd.f32 0.0, %v1435
        %1437 = vmatmul.f32.gmra.mxu0 %v1380
        %v1438 = vpop.f32.mrf.mxu0
        %v1439 = vadd.f32 0.0, %v1438
        %1440 = vdwg.mxu0
        %1441 = vmatpush.msra.mxu0 0.0
        %1442 = vmatpush.msra.mxu0 0.0
        %1443 = vmatpush.msra.mxu0 0.0
        %1444 = vmatpush.msra.mxu0 0.0
        %1445 = vmatpush.msra.mxu0 0.0
        %1446 = vmatpush.msra.mxu0 0.0
        %1447 = vmatpush.msra.mxu0 0.0
        %1448 = vmatpush.msra.mxu0 0.0
        %1449 = vmatpush.msra.mxu0 0.0
        %1450 = vmatpush.msra.mxu0 0.0
        %1451 = vmatpush.msra.mxu0 0.0
        %1452 = vmatpush.msra.mxu0 0.0
        %1453 = vmatpush.msra.mxu0 0.0
        %1454 = vmatpush.msra.mxu0 0.0
        %1455 = vmatpush.msra.mxu0 %v1379
        %1456 = vmatpush.msra.mxu0 %v1377
        %1457 = vmatmul.f32.gmra.mxu0 %v397
        %v1458 = vpop.f32.mrf.mxu0
        %v1459 = vadd.f32 0.0, %v1458
        %1460 = vmatmul.f32.gmra.mxu0 %v399
        %v1461 = vpop.f32.mrf.mxu0
        %v1462 = vadd.f32 0.0, %v1461
        %1463 = vmatmul.f32.gmra.mxu0 %v401
        %v1464 = vpop.f32.mrf.mxu0
        %v1465 = vadd.f32 0.0, %v1464
        %1466 = vmatmul.f32.gmra.mxu0 %v403
        %v1467 = vpop.f32.mrf.mxu0
        %v1468 = vadd.f32 0.0, %v1467
        %1469 = vmatmul.f32.gmra.mxu0 %v405
        %v1470 = vpop.f32.mrf.mxu0
        %v1471 = vadd.f32 0.0, %v1470
        %1472 = vmatmul.f32.gmra.mxu0 %v407
        %v1473 = vpop.f32.mrf.mxu0
        %v1474 = vadd.f32 0.0, %v1473
        %1475 = vmatmul.f32.gmra.mxu0 %v409
        %v1476 = vpop.f32.mrf.mxu0
        %v1477 = vadd.f32 0.0, %v1476
        %1478 = vmatmul.f32.gmra.mxu0 %v411
        %v1479 = vpop.f32.mrf.mxu0
        %v1480 = vadd.f32 0.0, %v1479
        %1481 = vmatmul.f32.gmra.mxu0 %v413
        %v1482 = vpop.f32.mrf.mxu0
        %v1483 = vadd.f32 0.0, %v1482
        %1484 = vmatmul.f32.gmra.mxu0 %v415
        %v1485 = vpop.f32.mrf.mxu0
        %v1486 = vadd.f32 0.0, %v1485
        %1487 = vmatmul.f32.gmra.mxu0 %v417
        %v1488 = vpop.f32.mrf.mxu0
        %v1489 = vadd.f32 0.0, %v1488
        %1490 = vmatmul.f32.gmra.mxu0 %v419
        %v1491 = vpop.f32.mrf.mxu0
        %v1492 = vadd.f32 0.0, %v1491
        %1493 = vmatmul.f32.gmra.mxu0 %v421
        %v1494 = vpop.f32.mrf.mxu0
        %v1495 = vadd.f32 0.0, %v1494
        %1496 = vmatmul.f32.gmra.mxu0 %v1380
        %v1497 = vpop.f32.mrf.mxu0
        %v1498 = vadd.f32 0.0, %v1497
        %1499 = vdwg.mxu0
        %v1500 = vadd.f32 %v1275, %v1400
        %v1501 = vadd.f32 %v1334, %v1459
        %v1502 = vadd.f32 %v1278, %v1403
        %v1503 = vadd.f32 %v1337, %v1462
        %v1504 = vadd.f32 %v1281, %v1406
        %v1505 = vadd.f32 %v1340, %v1465
        %v1506 = vadd.f32 %v1284, %v1409
        %v1507 = vadd.f32 %v1343, %v1468
        %v1508 = vadd.f32 %v1287, %v1412
        %v1509 = vadd.f32 %v1346, %v1471
        %v1510 = vadd.f32 %v1290, %v1415
        %v1511 = vadd.f32 %v1349, %v1474
        %v1512 = vadd.f32 %v1293, %v1418
        %v1513 = vadd.f32 %v1352, %v1477
        %v1514 = vadd.f32 %v1296, %v1421
        %v1515 = vadd.f32 %v1355, %v1480
        %v1516 = vadd.f32 %v1299, %v1424
        %v1517 = vadd.f32 %v1358, %v1483
        %v1518 = vadd.f32 %v1302, %v1427
        %v1519 = vadd.f32 %v1361, %v1486
        %v1520 = vadd.f32 %v1305, %v1430
        %v1521 = vadd.f32 %v1364, %v1489
        %v1522 = vadd.f32 %v1308, %v1433
        %v1523 = vadd.f32 %v1367, %v1492
        %v1524 = vadd.f32 %v1311, %v1436
        %v1525 = vadd.f32 %v1370, %v1495
        %v1526 = vadd.f32 %v1314, %v1439
        %v1527 = vadd.f32 %v1373, %v1498
        %s1528 = scalar_lea.vmem %s3, 96
        %v1529 = vld [vmem:[%s1528] sm:$0xff]
        %v1530 = vld [vmem:[%s1528 + $0x8] sm:$0xff]
        %v1531 = vld [vmem:[%s1528 + $0x10] sm:$0xff]
        %v1532 = vld [vmem:[%s1528 + $0x18] sm:$0xff]
        %v1533 = vsel %vm396, %v732, 0
        %1535 = vmatpush.msra.mxu0 0.0
        %1536 = vmatpush.msra.mxu0 0.0
        %1537 = vmatpush.msra.mxu0 0.0
        %1538 = vmatpush.msra.mxu0 0.0
        %1539 = vmatpush.msra.mxu0 0.0
        %1540 = vmatpush.msra.mxu0 0.0
        %1541 = vmatpush.msra.mxu0 0.0
        %1542 = vmatpush.msra.mxu0 0.0
        %1543 = vmatpush.msra.mxu0 0.0
        %1544 = vmatpush.msra.mxu0 0.0
        %1545 = vmatpush.msra.mxu0 0.0
        %1546 = vmatpush.msra.mxu0 0.0
        %1547 = vmatpush.msra.mxu0 0.0
        %1548 = vmatpush.msra.mxu0 0.0
        %1549 = vmatpush.msra.mxu0 %v1531
        %1550 = vmatpush.msra.mxu0 %v1529
        %1551 = vmatmul.f32.gmra.mxu0 %v734
        %v1552 = vpop.f32.mrf.mxu0
        %v1553 = vadd.f32 0.0, %v1552
        %1554 = vmatmul.f32.gmra.mxu0 %v736
        %v1555 = vpop.f32.mrf.mxu0
        %v1556 = vadd.f32 0.0, %v1555
        %1557 = vmatmul.f32.gmra.mxu0 %v738
        %v1558 = vpop.f32.mrf.mxu0
        %v1559 = vadd.f32 0.0, %v1558
        %1560 = vmatmul.f32.gmra.mxu0 %v740
        %v1561 = vpop.f32.mrf.mxu0
        %v1562 = vadd.f32 0.0, %v1561
        %1563 = vmatmul.f32.gmra.mxu0 %v742
        %v1564 = vpop.f32.mrf.mxu0
        %v1565 = vadd.f32 0.0, %v1564
        %1566 = vmatmul.f32.gmra.mxu0 %v744
        %v1567 = vpop.f32.mrf.mxu0
        %v1568 = vadd.f32 0.0, %v1567
        %1569 = vmatmul.f32.gmra.mxu0 %v746
        %v1570 = vpop.f32.mrf.mxu0
        %v1571 = vadd.f32 0.0, %v1570
        %1572 = vmatmul.f32.gmra.mxu0 %v748
        %v1573 = vpop.f32.mrf.mxu0
        %v1574 = vadd.f32 0.0, %v1573
        %1575 = vmatmul.f32.gmra.mxu0 %v750
        %v1576 = vpop.f32.mrf.mxu0
        %v1577 = vadd.f32 0.0, %v1576
        %1578 = vmatmul.f32.gmra.mxu0 %v752
        %v1579 = vpop.f32.mrf.mxu0
        %v1580 = vadd.f32 0.0, %v1579
        %1581 = vmatmul.f32.gmra.mxu0 %v754
        %v1582 = vpop.f32.mrf.mxu0
        %v1583 = vadd.f32 0.0, %v1582
        %1584 = vmatmul.f32.gmra.mxu0 %v756
        %v1585 = vpop.f32.mrf.mxu0
        %v1586 = vadd.f32 0.0, %v1585
        %1587 = vmatmul.f32.gmra.mxu0 %v758
        %v1588 = vpop.f32.mrf.mxu0
        %v1589 = vadd.f32 0.0, %v1588
        %1590 = vmatmul.f32.gmra.mxu0 %v1533
        %v1591 = vpop.f32.mrf.mxu0
        %v1592 = vadd.f32 0.0, %v1591
        %1593 = vdwg.mxu0
        %1594 = vmatpush.msra.mxu0 0.0
        %1595 = vmatpush.msra.mxu0 0.0
        %1596 = vmatpush.msra.mxu0 0.0
        %1597 = vmatpush.msra.mxu0 0.0
        %1598 = vmatpush.msra.mxu0 0.0
        %1599 = vmatpush.msra.mxu0 0.0
        %1600 = vmatpush.msra.mxu0 0.0
        %1601 = vmatpush.msra.mxu0 0.0
        %1602 = vmatpush.msra.mxu0 0.0
        %1603 = vmatpush.msra.mxu0 0.0
        %1604 = vmatpush.msra.mxu0 0.0
        %1605 = vmatpush.msra.mxu0 0.0
        %1606 = vmatpush.msra.mxu0 0.0
        %1607 = vmatpush.msra.mxu0 0.0
        %1608 = vmatpush.msra.mxu0 %v1532
        %1609 = vmatpush.msra.mxu0 %v1530
        %1610 = vmatmul.f32.gmra.mxu0 %v734
        %v1611 = vpop.f32.mrf.mxu0
        %v1612 = vadd.f32 0.0, %v1611
        %1613 = vmatmul.f32.gmra.mxu0 %v736
        %v1614 = vpop.f32.mrf.mxu0
        %v1615 = vadd.f32 0.0, %v1614
        %1616 = vmatmul.f32.gmra.mxu0 %v738
        %v1617 = vpop.f32.mrf.mxu0
        %v1618 = vadd.f32 0.0, %v1617
        %1619 = vmatmul.f32.gmra.mxu0 %v740
        %v1620 = vpop.f32.mrf.mxu0
        %v1621 = vadd.f32 0.0, %v1620
        %1622 = vmatmul.f32.gmra.mxu0 %v742
        %v1623 = vpop.f32.mrf.mxu0
        %v1624 = vadd.f32 0.0, %v1623
        %1625 = vmatmul.f32.gmra.mxu0 %v744
        %v1626 = vpop.f32.mrf.mxu0
        %v1627 = vadd.f32 0.0, %v1626
        %1628 = vmatmul.f32.gmra.mxu0 %v746
        %v1629 = vpop.f32.mrf.mxu0
        %v1630 = vadd.f32 0.0, %v1629
        %1631 = vmatmul.f32.gmra.mxu0 %v748
        %v1632 = vpop.f32.mrf.mxu0
        %v1633 = vadd.f32 0.0, %v1632
        %1634 = vmatmul.f32.gmra.mxu0 %v750
        %v1635 = vpop.f32.mrf.mxu0
        %v1636 = vadd.f32 0.0, %v1635
        %1637 = vmatmul.f32.gmra.mxu0 %v752
        %v1638 = vpop.f32.mrf.mxu0
        %v1639 = vadd.f32 0.0, %v1638
        %1640 = vmatmul.f32.gmra.mxu0 %v754
        %v1641 = vpop.f32.mrf.mxu0
        %v1642 = vadd.f32 0.0, %v1641
        %1643 = vmatmul.f32.gmra.mxu0 %v756
        %v1644 = vpop.f32.mrf.mxu0
        %v1645 = vadd.f32 0.0, %v1644
        %1646 = vmatmul.f32.gmra.mxu0 %v758
        %v1647 = vpop.f32.mrf.mxu0
        %v1648 = vadd.f32 0.0, %v1647
        %1649 = vmatmul.f32.gmra.mxu0 %v1533
        %v1650 = vpop.f32.mrf.mxu0
        %v1651 = vadd.f32 0.0, %v1650
        %1652 = vdwg.mxu0
        %v1653 = vadd.f32 %v1500, %v1553
        %v1654 = vadd.f32 %v1501, %v1612
        %v1655 = vadd.f32 %v1502, %v1556
        %v1656 = vadd.f32 %v1503, %v1615
        %v1657 = vadd.f32 %v1504, %v1559
        %v1658 = vadd.f32 %v1505, %v1618
        %v1659 = vadd.f32 %v1506, %v1562
        %v1660 = vadd.f32 %v1507, %v1621
        %v1661 = vadd.f32 %v1508, %v1565
        %v1662 = vadd.f32 %v1509, %v1624
        %v1663 = vadd.f32 %v1510, %v1568
        %v1664 = vadd.f32 %v1511, %v1627
        %v1665 = vadd.f32 %v1512, %v1571
        %v1666 = vadd.f32 %v1513, %v1630
        %v1667 = vadd.f32 %v1514, %v1574
        %v1668 = vadd.f32 %v1515, %v1633
        %v1669 = vadd.f32 %v1516, %v1577
        %v1670 = vadd.f32 %v1517, %v1636
        %v1671 = vadd.f32 %v1518, %v1580
        %v1672 = vadd.f32 %v1519, %v1639
        %v1673 = vadd.f32 %v1520, %v1583
        %v1674 = vadd.f32 %v1521, %v1642
        %v1675 = vadd.f32 %v1522, %v1586
        %v1676 = vadd.f32 %v1523, %v1645
        %v1677 = vadd.f32 %v1524, %v1589
        %v1678 = vadd.f32 %v1525, %v1648
        %v1679 = vadd.f32 %v1526, %v1592
        %v1680 = vadd.f32 %v1527, %v1651
        %v1681 = vld [vmem:[%s4] sm:$0x3]
        %v1683 = vperm.slane %v1681, 0
        %v1684 = vperm.slane %v1681, 1
        %v1687 = vadd.f32 %v1653, %v1683
        %v1688 = vadd.f32 %v1654, %v1684
        %v1689 = vadd.f32 %v1655, %v1683
        %v1690 = vadd.f32 %v1656, %v1684
        %v1691 = vadd.f32 %v1657, %v1683
        %v1692 = vadd.f32 %v1658, %v1684
        %v1693 = vadd.f32 %v1659, %v1683
        %v1694 = vadd.f32 %v1660, %v1684
        %v1695 = vadd.f32 %v1661, %v1683
        %v1696 = vadd.f32 %v1662, %v1684
        %v1697 = vadd.f32 %v1663, %v1683
        %v1698 = vadd.f32 %v1664, %v1684
        %v1699 = vadd.f32 %v1665, %v1683
        %v1700 = vadd.f32 %v1666, %v1684
        %v1701 = vadd.f32 %v1667, %v1683
        %v1702 = vadd.f32 %v1668, %v1684
        %v1703 = vadd.f32 %v1669, %v1683
        %v1704 = vadd.f32 %v1670, %v1684
        %v1705 = vadd.f32 %v1671, %v1683
        %v1706 = vadd.f32 %v1672, %v1684
        %v1707 = vadd.f32 %v1673, %v1683
        %v1708 = vadd.f32 %v1674, %v1684
        %v1709 = vadd.f32 %v1675, %v1683
        %v1710 = vadd.f32 %v1676, %v1684
        %v1711 = vadd.f32 %v1677, %v1683
        %v1712 = vadd.f32 %v1678, %v1684
        %v1713 = vadd.f32 %v1679, %v1683
        %v1714 = vadd.f32 %v1680, %v1684
        %v1715 = vmax.f32 %v1687, 0.0
        %v1716 = vmax.f32 %v1688, 0.0
        %v1717 = vmax.f32 %v1689, 0.0
        %v1718 = vmax.f32 %v1690, 0.0
        %v1719 = vmax.f32 %v1691, 0.0
        %v1720 = vmax.f32 %v1692, 0.0
        %v1721 = vmax.f32 %v1693, 0.0
        %v1722 = vmax.f32 %v1694, 0.0
        %v1723 = vmax.f32 %v1695, 0.0
        %v1724 = vmax.f32 %v1696, 0.0
        %v1725 = vmax.f32 %v1697, 0.0
        %v1726 = vmax.f32 %v1698, 0.0
        %v1727 = vmax.f32 %v1699, 0.0
        %v1728 = vmax.f32 %v1700, 0.0
        %v1729 = vmax.f32 %v1701, 0.0
        %v1730 = vmax.f32 %v1702, 0.0
        %v1731 = vmax.f32 %v1703, 0.0
        %v1732 = vmax.f32 %v1704, 0.0
        %v1733 = vmax.f32 %v1705, 0.0
        %v1734 = vmax.f32 %v1706, 0.0
        %v1735 = vmax.f32 %v1707, 0.0
        %v1736 = vmax.f32 %v1708, 0.0
        %v1737 = vmax.f32 %v1709, 0.0
        %v1738 = vmax.f32 %v1710, 0.0
        %v1739 = vmax.f32 %v1711, 0.0
        %v1740 = vmax.f32 %v1712, 0.0
        %v1741 = vmax.f32 %v1713, 0.0
        %v1742 = vmax.f32 %v1714, 0.0
        %v1743 = vmax.f32 %v1715, %v1719
        %v1744 = vmax.f32 %v1717, %v1721
        %v1745 = vmax.f32 %v1743, %v1723
        %v1746 = vmax.f32 %v1744, %v1725
        %v1747 = vmax.f32 %v1745, %v1727
        %v1748 = vmax.f32 %v1746, %v1729
        %v1749 = vmax.f32 %v1747, %v1731
        %v1750 = vmax.f32 %v1748, %v1733
        %v1751 = vmax.f32 %v1749, %v1735
        %v1752 = vmax.f32 %v1750, %v1737
        %v1753 = vmax.f32 %v1751, %v1739
        %vm1754 = vcmask 1040384
        %v1755 = vsel %vm1754, %v1741, -inf
        %v1756 = vmax.f32 %v1752, %v1755
        %v1757 = vmax.f32 %v1753, %v1756
        %v1758 = vrot.slane %v1757, 4
        %v1759 = vmax.f32 %v1757, %v1758
        %v1760 = vrot.slane %v1759, 2
        %v1761 = vmax.f32 %v1759, %v1760
        %v1762 = vrot.slane %v1761, 1
        %v1763 = vmax.f32 %v1761, %v1762
        %v1764 = vsel %vm974, %v1716, -inf
        %v1765 = vsel %vm974, %v1718, -inf
        %v1766 = vsel %vm974, %v1720, -inf
        %v1767 = vmax.f32 %v1764, %v1766
        %v1768 = vsel %vm974, %v1722, -inf
        %v1769 = vmax.f32 %v1765, %v1768
        %v1770 = vsel %vm974, %v1724, -inf
        %v1771 = vmax.f32 %v1767, %v1770
        %v1772 = vsel %vm974, %v1726, -inf
        %v1773 = vmax.f32 %v1769, %v1772
        %v1774 = vsel %vm974, %v1728, -inf
        %v1775 = vmax.f32 %v1771, %v1774
        %v1776 = vsel %vm974, %v1730, -inf
        %v1777 = vmax.f32 %v1773, %v1776
        %v1778 = vsel %vm974, %v1732, -inf
        %v1779 = vmax.f32 %v1775, %v1778
        %v1780 = vsel %vm974, %v1734, -inf
        %v1781 = vmax.f32 %v1777, %v1780
        %v1782 = vsel %vm974, %v1736, -inf
        %v1783 = vmax.f32 %v1779, %v1782
        %v1784 = vsel %vm974, %v1738, -inf
        %v1785 = vmax.f32 %v1781, %v1784
        %v1786 = vsel %vm974, %v1740, -inf
        %v1787 = vmax.f32 %v1783, %v1786
        %vm1788 = vcmask 172032
        %v1789 = vsel %vm1788, %v1742, -inf
        %v1790 = vmax.f32 %v1785, %v1789
        %v1791 = vmax.f32 %v1787, %v1790
        %v1792 = vrot.slane %v1791, 4
        %v1793 = vmax.f32 %v1791, %v1792
        %v1794 = vrot.slane %v1793, 2
        %v1795 = vmax.f32 %v1793, %v1794
        %v1796 = vrot.slane %v1795, 1
        %v1797 = vmax.f32 %v1795, %v1796
        %v1798 = vld [vmem:[%s7 + $0x96] sm:$0xff]
        %v1799 = vld [vmem:[%s7 + $0x9e] sm:$0xff]
        %v1800 = vld [vmem:[%s7 + $0xa6] sm:$0xff]
        %v1801 = vld [vmem:[%s7 + $0xae] sm:$0xff]
        %v1802 = vld [vmem:[%s7 + $0xb6] sm:$0xff]
        %v1803 = vld [vmem:[%s7 + $0xbe] sm:$0xff]
        %v1804 = vld [vmem:[%s7 + $0xc6] sm:$0xff]
        %v1805 = vld [vmem:[%s7 + $0xce] sm:$0xff]
        %v1806 = vld [vmem:[%s7 + $0xd6] sm:$0xff]
        %v1807 = vld [vmem:[%s7 + $0xde] sm:$0xff]
        %v1808 = vld [vmem:[%s7 + $0xe6] sm:$0xff]
        %v1809 = vld [vmem:[%s7 + $0xee] sm:$0xff]
        %v1810 = vld [vmem:[%s7 + $0xf6] sm:$0xff]
        %v1811 = vld [vmem:[%s7 + $0xfe] sm:$0xff]
        %v1812 = vld [vmem:[%s7 + $0x106] sm:$0xff]
        %v1813 = vld [vmem:[%s7 + $0x10e] sm:$0xff]
        %v1814 = vld [vmem:[%s7 + $0x116] sm:$0xff]
        %v1815 = vld [vmem:[%s7 + $0x11e] sm:$0xff]
        %v1816 = vld [vmem:[%s7 + $0x126] sm:$0x3f]
        %v1818 = vsel %vm974, %v1797, 0
        %v1821 = vsel %vm535, %v1816, 0
        %1823 = vmatpush.msra.mxu0 %v1813
        %1824 = vmatpush.msra.mxu0 %v1812
        %1825 = vmatpush.msra.mxu0 %v1811
        %1826 = vmatpush.msra.mxu0 %v1810
        %1827 = vmatpush.msra.mxu0 %v1809
        %1828 = vmatpush.msra.mxu0 %v1808
        %1829 = vmatpush.msra.mxu0 %v1807
        %1830 = vmatpush.msra.mxu0 %v1806
        %1831 = vmatpush.msra.mxu0 %v1805
        %1832 = vmatpush.msra.mxu0 %v1804
        %1833 = vmatpush.msra.mxu0 %v1803
        %1834 = vmatpush.msra.mxu0 %v1802
        %1835 = vmatpush.msra.mxu0 %v1801
        %1836 = vmatpush.msra.mxu0 %v1800
        %1837 = vmatpush.msra.mxu0 %v1799
        %1838 = vmatpush.msra.mxu0 %v1798
        %1839 = vmatmul.f32.gmra.mxu0 %v1763
        %v1840 = vpop.f32.mrf.mxu0
        %v1841 = vadd.f32 0.0, %v1840
        %1842 = vdwg.mxu0
        %1843 = vmatpush.msra.mxu0 0.0
        %1844 = vmatpush.msra.mxu0 0.0
        %1845 = vmatpush.msra.mxu0 0.0
        %1846 = vmatpush.msra.mxu0 0.0
        %1847 = vmatpush.msra.mxu0 0.0
        %1848 = vmatpush.msra.mxu0 0.0
        %1849 = vmatpush.msra.mxu0 0.0
        %1850 = vmatpush.msra.mxu0 0.0
        %1851 = vmatpush.msra.mxu0 0.0
        %1852 = vmatpush.msra.mxu0 0.0
        %1853 = vmatpush.msra.mxu0 0.0
        %1854 = vmatpush.msra.mxu0 0.0
        %1855 = vmatpush.msra.mxu0 0.0
        %1856 = vmatpush.msra.mxu0 %v1821
        %1857 = vmatpush.msra.mxu0 %v1815
        %1858 = vmatpush.msra.mxu0 %v1814
        %1859 = vmatmul.f32.gmra.mxu0 %v1818
        %v1860 = vpop.f32.mrf.mxu0
        %v1861 = vadd.f32 %v1841, %v1860
        %1862 = vdwg.mxu0
        %v1863 = vadd.f32 %v1071, %v1861
        %v1864 = vld [vmem:[%s5] sm:$0xff]
        %v1865 = vld [vmem:[%s5 + $0x8] sm:$0xff]
        %v1866 = vld [vmem:[%s5 + $0x10] sm:$0xff]
        %v1867 = vld [vmem:[%s5 + $0x18] sm:$0xff]
        %s1868 = scalar_lea.vmem %s5, 32
        %v1869 = vld [vmem:[%s1868] sm:$0xff]
        %v1870 = vld [vmem:[%s1868 + $0x8] sm:$0xff]
        %v1871 = vld [vmem:[%s1868 + $0x10] sm:$0xff]
        %v1872 = vld [vmem:[%s1868 + $0x18] sm:$0xff]
        %1873 = vmatpush.msra.mxu0 0.0
        %1874 = vmatpush.msra.mxu0 0.0
        %1875 = vmatpush.msra.mxu0 0.0
        %1876 = vmatpush.msra.mxu0 0.0
        %1877 = vmatpush.msra.mxu0 0.0
        %1878 = vmatpush.msra.mxu0 0.0
        %1879 = vmatpush.msra.mxu0 0.0
        %1880 = vmatpush.msra.mxu0 0.0
        %1881 = vmatpush.msra.mxu0 0.0
        %1882 = vmatpush.msra.mxu0 0.0
        %1883 = vmatpush.msra.mxu0 0.0
        %1884 = vmatpush.msra.mxu0 0.0
        %1885 = vmatpush.msra.mxu0 0.0
        %1886 = vmatpush.msra.mxu0 0.0
        %1887 = vmatpush.msra.mxu0 %v1871
        %1888 = vmatpush.msra.mxu0 %v1869
        %1889 = vmatmul.f32.gmra.mxu0 %v1229
        %v1890 = vpop.f32.mrf.mxu0
        %v1891 = vadd.f32 0.0, %v1890
        %1892 = vmatmul.f32.gmra.mxu0 %v1231
        %v1893 = vpop.f32.mrf.mxu0
        %v1894 = vadd.f32 0.0, %v1893
        %1895 = vmatmul.f32.gmra.mxu0 %v1233
        %v1896 = vpop.f32.mrf.mxu0
        %v1897 = vadd.f32 0.0, %v1896
        %1898 = vmatmul.f32.gmra.mxu0 %v1235
        %v1899 = vpop.f32.mrf.mxu0
        %v1900 = vadd.f32 0.0, %v1899
        %1901 = vmatmul.f32.gmra.mxu0 %v1237
        %v1902 = vpop.f32.mrf.mxu0
        %v1903 = vadd.f32 0.0, %v1902
        %1904 = vmatmul.f32.gmra.mxu0 %v1239
        %v1905 = vpop.f32.mrf.mxu0
        %v1906 = vadd.f32 0.0, %v1905
        %1907 = vmatmul.f32.gmra.mxu0 %v1241
        %v1908 = vpop.f32.mrf.mxu0
        %v1909 = vadd.f32 0.0, %v1908
        %1910 = vmatmul.f32.gmra.mxu0 %v1243
        %v1911 = vpop.f32.mrf.mxu0
        %v1912 = vadd.f32 0.0, %v1911
        %1913 = vmatmul.f32.gmra.mxu0 %v1245
        %v1914 = vpop.f32.mrf.mxu0
        %v1915 = vadd.f32 0.0, %v1914
        %1916 = vmatmul.f32.gmra.mxu0 %v1247
        %v1917 = vpop.f32.mrf.mxu0
        %v1918 = vadd.f32 0.0, %v1917
        %1919 = vmatmul.f32.gmra.mxu0 %v1249
        %v1920 = vpop.f32.mrf.mxu0
        %v1921 = vadd.f32 0.0, %v1920
        %1922 = vmatmul.f32.gmra.mxu0 %v1251
        %v1923 = vpop.f32.mrf.mxu0
        %v1924 = vadd.f32 0.0, %v1923
        %1925 = vmatmul.f32.gmra.mxu0 %v1253
        %v1926 = vpop.f32.mrf.mxu0
        %v1927 = vadd.f32 0.0, %v1926
        %1928 = vmatmul.f32.gmra.mxu0 %v1255
        %v1929 = vpop.f32.mrf.mxu0
        %v1930 = vadd.f32 0.0, %v1929
        %1931 = vdwg.mxu0
        %1932 = vmatpush.msra.mxu0 0.0
        %1933 = vmatpush.msra.mxu0 0.0
        %1934 = vmatpush.msra.mxu0 0.0
        %1935 = vmatpush.msra.mxu0 0.0
        %1936 = vmatpush.msra.mxu0 0.0
        %1937 = vmatpush.msra.mxu0 0.0
        %1938 = vmatpush.msra.mxu0 0.0
        %1939 = vmatpush.msra.mxu0 0.0
        %1940 = vmatpush.msra.mxu0 0.0
        %1941 = vmatpush.msra.mxu0 0.0
        %1942 = vmatpush.msra.mxu0 0.0
        %1943 = vmatpush.msra.mxu0 0.0
        %1944 = vmatpush.msra.mxu0 0.0
        %1945 = vmatpush.msra.mxu0 0.0
        %1946 = vmatpush.msra.mxu0 %v1872
        %1947 = vmatpush.msra.mxu0 %v1870
        %1948 = vmatmul.f32.gmra.mxu0 %v1229
        %v1949 = vpop.f32.mrf.mxu0
        %v1950 = vadd.f32 0.0, %v1949
        %1951 = vmatmul.f32.gmra.mxu0 %v1231
        %v1952 = vpop.f32.mrf.mxu0
        %v1953 = vadd.f32 0.0, %v1952
        %1954 = vmatmul.f32.gmra.mxu0 %v1233
        %v1955 = vpop.f32.mrf.mxu0
        %v1956 = vadd.f32 0.0, %v1955
        %1957 = vmatmul.f32.gmra.mxu0 %v1235
        %v1958 = vpop.f32.mrf.mxu0
        %v1959 = vadd.f32 0.0, %v1958
        %1960 = vmatmul.f32.gmra.mxu0 %v1237
        %v1961 = vpop.f32.mrf.mxu0
        %v1962 = vadd.f32 0.0, %v1961
        %1963 = vmatmul.f32.gmra.mxu0 %v1239
        %v1964 = vpop.f32.mrf.mxu0
        %v1965 = vadd.f32 0.0, %v1964
        %1966 = vmatmul.f32.gmra.mxu0 %v1241
        %v1967 = vpop.f32.mrf.mxu0
        %v1968 = vadd.f32 0.0, %v1967
        %1969 = vmatmul.f32.gmra.mxu0 %v1243
        %v1970 = vpop.f32.mrf.mxu0
        %v1971 = vadd.f32 0.0, %v1970
        %1972 = vmatmul.f32.gmra.mxu0 %v1245
        %v1973 = vpop.f32.mrf.mxu0
        %v1974 = vadd.f32 0.0, %v1973
        %1975 = vmatmul.f32.gmra.mxu0 %v1247
        %v1976 = vpop.f32.mrf.mxu0
        %v1977 = vadd.f32 0.0, %v1976
        %1978 = vmatmul.f32.gmra.mxu0 %v1249
        %v1979 = vpop.f32.mrf.mxu0
        %v1980 = vadd.f32 0.0, %v1979
        %1981 = vmatmul.f32.gmra.mxu0 %v1251
        %v1982 = vpop.f32.mrf.mxu0
        %v1983 = vadd.f32 0.0, %v1982
        %1984 = vmatmul.f32.gmra.mxu0 %v1253
        %v1985 = vpop.f32.mrf.mxu0
        %v1986 = vadd.f32 0.0, %v1985
        %1987 = vmatmul.f32.gmra.mxu0 %v1255
        %v1988 = vpop.f32.mrf.mxu0
        %v1989 = vadd.f32 0.0, %v1988
        %1990 = vdwg.mxu0
        %v1991 = vsel %vm396, %v330, 0
        %v1993 = vsel %vm396, %v331, 0
        %v1995 = vsel %vm396, %v332, 0
        %v1997 = vsel %vm396, %v333, 0
        %v1999 = vsel %vm396, %v334, 0
        %v2001 = vsel %vm396, %v335, 0
        %v2003 = vsel %vm396, %v336, 0
        %v2005 = vsel %vm396, %v337, 0
        %v2007 = vsel %vm396, %v338, 0
        %v2009 = vsel %vm396, %v339, 0
        %v2011 = vsel %vm396, %v340, 0
        %v2013 = vsel %vm396, %v341, 0
        %v2015 = vsel %vm396, %v342, 0
        %v2017 = vsel %vm396, %v343, 0
        %2019 = vmatpush.msra.mxu0 0.0
        %2020 = vmatpush.msra.mxu0 0.0
        %2021 = vmatpush.msra.mxu0 0.0
        %2022 = vmatpush.msra.mxu0 0.0
        %2023 = vmatpush.msra.mxu0 0.0
        %2024 = vmatpush.msra.mxu0 0.0
        %2025 = vmatpush.msra.mxu0 0.0
        %2026 = vmatpush.msra.mxu0 0.0
        %2027 = vmatpush.msra.mxu0 0.0
        %2028 = vmatpush.msra.mxu0 0.0
        %2029 = vmatpush.msra.mxu0 0.0
        %2030 = vmatpush.msra.mxu0 0.0
        %2031 = vmatpush.msra.mxu0 0.0
        %2032 = vmatpush.msra.mxu0 0.0
        %2033 = vmatpush.msra.mxu0 %v1866
        %2034 = vmatpush.msra.mxu0 %v1864
        %2035 = vmatmul.f32.gmra.mxu0 %v1991
        %v2036 = vpop.f32.mrf.mxu0
        %v2037 = vadd.f32 %v1891, %v2036
        %2038 = vmatmul.f32.gmra.mxu0 %v1993
        %v2039 = vpop.f32.mrf.mxu0
        %v2040 = vadd.f32 %v1894, %v2039
        %2041 = vmatmul.f32.gmra.mxu0 %v1995
        %v2042 = vpop.f32.mrf.mxu0
        %v2043 = vadd.f32 %v1897, %v2042
        %2044 = vmatmul.f32.gmra.mxu0 %v1997
        %v2045 = vpop.f32.mrf.mxu0
        %v2046 = vadd.f32 %v1900, %v2045
        %2047 = vmatmul.f32.gmra.mxu0 %v1999
        %v2048 = vpop.f32.mrf.mxu0
        %v2049 = vadd.f32 %v1903, %v2048
        %2050 = vmatmul.f32.gmra.mxu0 %v2001
        %v2051 = vpop.f32.mrf.mxu0
        %v2052 = vadd.f32 %v1906, %v2051
        %2053 = vmatmul.f32.gmra.mxu0 %v2003
        %v2054 = vpop.f32.mrf.mxu0
        %v2055 = vadd.f32 %v1909, %v2054
        %2056 = vmatmul.f32.gmra.mxu0 %v2005
        %v2057 = vpop.f32.mrf.mxu0
        %v2058 = vadd.f32 %v1912, %v2057
        %2059 = vmatmul.f32.gmra.mxu0 %v2007
        %v2060 = vpop.f32.mrf.mxu0
        %v2061 = vadd.f32 %v1915, %v2060
        %2062 = vmatmul.f32.gmra.mxu0 %v2009
        %v2063 = vpop.f32.mrf.mxu0
        %v2064 = vadd.f32 %v1918, %v2063
        %2065 = vmatmul.f32.gmra.mxu0 %v2011
        %v2066 = vpop.f32.mrf.mxu0
        %v2067 = vadd.f32 %v1921, %v2066
        %2068 = vmatmul.f32.gmra.mxu0 %v2013
        %v2069 = vpop.f32.mrf.mxu0
        %v2070 = vadd.f32 %v1924, %v2069
        %2071 = vmatmul.f32.gmra.mxu0 %v2015
        %v2072 = vpop.f32.mrf.mxu0
        %v2073 = vadd.f32 %v1927, %v2072
        %2074 = vmatmul.f32.gmra.mxu0 %v2017
        %v2075 = vpop.f32.mrf.mxu0
        %v2076 = vadd.f32 %v1930, %v2075
        %2077 = vdwg.mxu0
        %2078 = vmatpush.msra.mxu0 0.0
        %2079 = vmatpush.msra.mxu0 0.0
        %2080 = vmatpush.msra.mxu0 0.0
        %2081 = vmatpush.msra.mxu0 0.0
        %2082 = vmatpush.msra.mxu0 0.0
        %2083 = vmatpush.msra.mxu0 0.0
        %2084 = vmatpush.msra.mxu0 0.0
        %2085 = vmatpush.msra.mxu0 0.0
        %2086 = vmatpush.msra.mxu0 0.0
        %2087 = vmatpush.msra.mxu0 0.0
        %2088 = vmatpush.msra.mxu0 0.0
        %2089 = vmatpush.msra.mxu0 0.0
        %2090 = vmatpush.msra.mxu0 0.0
        %2091 = vmatpush.msra.mxu0 0.0
        %2092 = vmatpush.msra.mxu0 %v1867
        %2093 = vmatpush.msra.mxu0 %v1865
        %2094 = vmatmul.f32.gmra.mxu0 %v1991
        %v2095 = vpop.f32.mrf.mxu0
        %v2096 = vadd.f32 %v1950, %v2095
        %2097 = vmatmul.f32.gmra.mxu0 %v1993
        %v2098 = vpop.f32.mrf.mxu0
        %v2099 = vadd.f32 %v1953, %v2098
        %2100 = vmatmul.f32.gmra.mxu0 %v1995
        %v2101 = vpop.f32.mrf.mxu0
        %v2102 = vadd.f32 %v1956, %v2101
        %2103 = vmatmul.f32.gmra.mxu0 %v1997
        %v2104 = vpop.f32.mrf.mxu0
        %v2105 = vadd.f32 %v1959, %v2104
        %2106 = vmatmul.f32.gmra.mxu0 %v1999
        %v2107 = vpop.f32.mrf.mxu0
        %v2108 = vadd.f32 %v1962, %v2107
        %2109 = vmatmul.f32.gmra.mxu0 %v2001
        %v2110 = vpop.f32.mrf.mxu0
        %v2111 = vadd.f32 %v1965, %v2110
        %2112 = vmatmul.f32.gmra.mxu0 %v2003
        %v2113 = vpop.f32.mrf.mxu0
        %v2114 = vadd.f32 %v1968, %v2113
        %2115 = vmatmul.f32.gmra.mxu0 %v2005
        %v2116 = vpop.f32.mrf.mxu0
        %v2117 = vadd.f32 %v1971, %v2116
        %2118 = vmatmul.f32.gmra.mxu0 %v2007
        %v2119 = vpop.f32.mrf.mxu0
        %v2120 = vadd.f32 %v1974, %v2119
        %2121 = vmatmul.f32.gmra.mxu0 %v2009
        %v2122 = vpop.f32.mrf.mxu0
        %v2123 = vadd.f32 %v1977, %v2122
        %2124 = vmatmul.f32.gmra.mxu0 %v2011
        %v2125 = vpop.f32.mrf.mxu0
        %v2126 = vadd.f32 %v1980, %v2125
        %2127 = vmatmul.f32.gmra.mxu0 %v2013
        %v2128 = vpop.f32.mrf.mxu0
        %v2129 = vadd.f32 %v1983, %v2128
        %2130 = vmatmul.f32.gmra.mxu0 %v2015
        %v2131 = vpop.f32.mrf.mxu0
        %v2132 = vadd.f32 %v1986, %v2131
        %2133 = vmatmul.f32.gmra.mxu0 %v2017
        %v2134 = vpop.f32.mrf.mxu0
        %v2135 = vadd.f32 %v1989, %v2134
        %2136 = vdwg.mxu0
        %s2137 = scalar_lea.vmem %s5, 64
        %v2138 = vld [vmem:[%s2137] sm:$0xff]
        %v2139 = vld [vmem:[%s2137 + $0x8] sm:$0xff]
        %v2140 = vld [vmem:[%s2137 + $0x10] sm:$0xff]
        %v2141 = vld [vmem:[%s2137 + $0x18] sm:$0xff]
        %2142 = vmatpush.msra.mxu0 0.0
        %2143 = vmatpush.msra.mxu0 0.0
        %2144 = vmatpush.msra.mxu0 0.0
        %2145 = vmatpush.msra.mxu0 0.0
        %2146 = vmatpush.msra.mxu0 0.0
        %2147 = vmatpush.msra.mxu0 0.0
        %2148 = vmatpush.msra.mxu0 0.0
        %2149 = vmatpush.msra.mxu0 0.0
        %2150 = vmatpush.msra.mxu0 0.0
        %2151 = vmatpush.msra.mxu0 0.0
        %2152 = vmatpush.msra.mxu0 0.0
        %2153 = vmatpush.msra.mxu0 0.0
        %2154 = vmatpush.msra.mxu0 0.0
        %2155 = vmatpush.msra.mxu0 0.0
        %2156 = vmatpush.msra.mxu0 %v2140
        %2157 = vmatpush.msra.mxu0 %v2138
        %2158 = vmatmul.f32.gmra.mxu0 %v563
        %v2159 = vpop.f32.mrf.mxu0
        %v2160 = vadd.f32 0.0, %v2159
        %2161 = vmatmul.f32.gmra.mxu0 %v565
        %v2162 = vpop.f32.mrf.mxu0
        %v2163 = vadd.f32 0.0, %v2162
        %2164 = vmatmul.f32.gmra.mxu0 %v567
        %v2165 = vpop.f32.mrf.mxu0
        %v2166 = vadd.f32 0.0, %v2165
        %2167 = vmatmul.f32.gmra.mxu0 %v569
        %v2168 = vpop.f32.mrf.mxu0
        %v2169 = vadd.f32 0.0, %v2168
        %2170 = vmatmul.f32.gmra.mxu0 %v571
        %v2171 = vpop.f32.mrf.mxu0
        %v2172 = vadd.f32 0.0, %v2171
        %2173 = vmatmul.f32.gmra.mxu0 %v573
        %v2174 = vpop.f32.mrf.mxu0
        %v2175 = vadd.f32 0.0, %v2174
        %2176 = vmatmul.f32.gmra.mxu0 %v575
        %v2177 = vpop.f32.mrf.mxu0
        %v2178 = vadd.f32 0.0, %v2177
        %2179 = vmatmul.f32.gmra.mxu0 %v577
        %v2180 = vpop.f32.mrf.mxu0
        %v2181 = vadd.f32 0.0, %v2180
        %2182 = vmatmul.f32.gmra.mxu0 %v579
        %v2183 = vpop.f32.mrf.mxu0
        %v2184 = vadd.f32 0.0, %v2183
        %2185 = vmatmul.f32.gmra.mxu0 %v581
        %v2186 = vpop.f32.mrf.mxu0
        %v2187 = vadd.f32 0.0, %v2186
        %2188 = vmatmul.f32.gmra.mxu0 %v583
        %v2189 = vpop.f32.mrf.mxu0
        %v2190 = vadd.f32 0.0, %v2189
        %2191 = vmatmul.f32.gmra.mxu0 %v585
        %v2192 = vpop.f32.mrf.mxu0
        %v2193 = vadd.f32 0.0, %v2192
        %2194 = vmatmul.f32.gmra.mxu0 %v587
        %v2195 = vpop.f32.mrf.mxu0
        %v2196 = vadd.f32 0.0, %v2195
        %2197 = vmatmul.f32.gmra.mxu0 %v1081
        %v2198 = vpop.f32.mrf.mxu0
        %v2199 = vadd.f32 0.0, %v2198
        %2200 = vdwg.mxu0
        %2201 = vmatpush.msra.mxu0 0.0
        %2202 = vmatpush.msra.mxu0 0.0
        %2203 = vmatpush.msra.mxu0 0.0
        %2204 = vmatpush.msra.mxu0 0.0
        %2205 = vmatpush.msra.mxu0 0.0
        %2206 = vmatpush.msra.mxu0 0.0
        %2207 = vmatpush.msra.mxu0 0.0
        %2208 = vmatpush.msra.mxu0 0.0
        %2209 = vmatpush.msra.mxu0 0.0
        %2210 = vmatpush.msra.mxu0 0.0
        %2211 = vmatpush.msra.mxu0 0.0
        %2212 = vmatpush.msra.mxu0 0.0
        %2213 = vmatpush.msra.mxu0 0.0
        %2214 = vmatpush.msra.mxu0 0.0
        %2215 = vmatpush.msra.mxu0 %v2141
        %2216 = vmatpush.msra.mxu0 %v2139
        %2217 = vmatmul.f32.gmra.mxu0 %v563
        %v2218 = vpop.f32.mrf.mxu0
        %v2219 = vadd.f32 0.0, %v2218
        %2220 = vmatmul.f32.gmra.mxu0 %v565
        %v2221 = vpop.f32.mrf.mxu0
        %v2222 = vadd.f32 0.0, %v2221
        %2223 = vmatmul.f32.gmra.mxu0 %v567
        %v2224 = vpop.f32.mrf.mxu0
        %v2225 = vadd.f32 0.0, %v2224
        %2226 = vmatmul.f32.gmra.mxu0 %v569
        %v2227 = vpop.f32.mrf.mxu0
        %v2228 = vadd.f32 0.0, %v2227
        %2229 = vmatmul.f32.gmra.mxu0 %v571
        %v2230 = vpop.f32.mrf.mxu0
        %v2231 = vadd.f32 0.0, %v2230
        %2232 = vmatmul.f32.gmra.mxu0 %v573
        %v2233 = vpop.f32.mrf.mxu0
        %v2234 = vadd.f32 0.0, %v2233
        %2235 = vmatmul.f32.gmra.mxu0 %v575
        %v2236 = vpop.f32.mrf.mxu0
        %v2237 = vadd.f32 0.0, %v2236
        %2238 = vmatmul.f32.gmra.mxu0 %v577
        %v2239 = vpop.f32.mrf.mxu0
        %v2240 = vadd.f32 0.0, %v2239
        %2241 = vmatmul.f32.gmra.mxu0 %v579
        %v2242 = vpop.f32.mrf.mxu0
        %v2243 = vadd.f32 0.0, %v2242
        %2244 = vmatmul.f32.gmra.mxu0 %v581
        %v2245 = vpop.f32.mrf.mxu0
        %v2246 = vadd.f32 0.0, %v2245
        %2247 = vmatmul.f32.gmra.mxu0 %v583
        %v2248 = vpop.f32.mrf.mxu0
        %v2249 = vadd.f32 0.0, %v2248
        %2250 = vmatmul.f32.gmra.mxu0 %v585
        %v2251 = vpop.f32.mrf.mxu0
        %v2252 = vadd.f32 0.0, %v2251
        %2253 = vmatmul.f32.gmra.mxu0 %v587
        %v2254 = vpop.f32.mrf.mxu0
        %v2255 = vadd.f32 0.0, %v2254
        %2256 = vmatmul.f32.gmra.mxu0 %v1081
        %v2257 = vpop.f32.mrf.mxu0
        %v2258 = vadd.f32 0.0, %v2257
        %2259 = vdwg.mxu0
        %v2260 = vadd.f32 %v2037, %v2160
        %v2261 = vadd.f32 %v2096, %v2219
        %v2262 = vadd.f32 %v2040, %v2163
        %v2263 = vadd.f32 %v2099, %v2222
        %v2264 = vadd.f32 %v2043, %v2166
        %v2265 = vadd.f32 %v2102, %v2225
        %v2266 = vadd.f32 %v2046, %v2169
        %v2267 = vadd.f32 %v2105, %v2228
        %v2268 = vadd.f32 %v2049, %v2172
        %v2269 = vadd.f32 %v2108, %v2231
        %v2270 = vadd.f32 %v2052, %v2175
        %v2271 = vadd.f32 %v2111, %v2234
        %v2272 = vadd.f32 %v2055, %v2178
        %v2273 = vadd.f32 %v2114, %v2237
        %v2274 = vadd.f32 %v2058, %v2181
        %v2275 = vadd.f32 %v2117, %v2240
        %v2276 = vadd.f32 %v2061, %v2184
        %v2277 = vadd.f32 %v2120, %v2243
        %v2278 = vadd.f32 %v2064, %v2187
        %v2279 = vadd.f32 %v2123, %v2246
        %v2280 = vadd.f32 %v2067, %v2190
        %v2281 = vadd.f32 %v2126, %v2249
        %v2282 = vadd.f32 %v2070, %v2193
        %v2283 = vadd.f32 %v2129, %v2252
        %v2284 = vadd.f32 %v2073, %v2196
        %v2285 = vadd.f32 %v2132, %v2255
        %v2286 = vadd.f32 %v2076, %v2199
        %v2287 = vadd.f32 %v2135, %v2258
        %s2288 = scalar_lea.vmem %s5, 96
        %v2289 = vld [vmem:[%s2288] sm:$0xff]
        %v2290 = vld [vmem:[%s2288 + $0x8] sm:$0xff]
        %v2291 = vld [vmem:[%s2288 + $0x10] sm:$0xff]
        %v2292 = vld [vmem:[%s2288 + $0x18] sm:$0xff]
        %2293 = vmatpush.msra.mxu0 0.0
        %2294 = vmatpush.msra.mxu0 0.0
        %2295 = vmatpush.msra.mxu0 0.0
        %2296 = vmatpush.msra.mxu0 0.0
        %2297 = vmatpush.msra.mxu0 0.0
        %2298 = vmatpush.msra.mxu0 0.0
        %2299 = vmatpush.msra.mxu0 0.0
        %2300 = vmatpush.msra.mxu0 0.0
        %2301 = vmatpush.msra.mxu0 0.0
        %2302 = vmatpush.msra.mxu0 0.0
        %2303 = vmatpush.msra.mxu0 0.0
        %2304 = vmatpush.msra.mxu0 0.0
        %2305 = vmatpush.msra.mxu0 0.0
        %2306 = vmatpush.msra.mxu0 0.0
        %2307 = vmatpush.msra.mxu0 %v2291
        %2308 = vmatpush.msra.mxu0 %v2289
        %2309 = vmatmul.f32.gmra.mxu0 %v397
        %v2310 = vpop.f32.mrf.mxu0
        %v2311 = vadd.f32 0.0, %v2310
        %2312 = vmatmul.f32.gmra.mxu0 %v399
        %v2313 = vpop.f32.mrf.mxu0
        %v2314 = vadd.f32 0.0, %v2313
        %2315 = vmatmul.f32.gmra.mxu0 %v401
        %v2316 = vpop.f32.mrf.mxu0
        %v2317 = vadd.f32 0.0, %v2316
        %2318 = vmatmul.f32.gmra.mxu0 %v403
        %v2319 = vpop.f32.mrf.mxu0
        %v2320 = vadd.f32 0.0, %v2319
        %2321 = vmatmul.f32.gmra.mxu0 %v405
        %v2322 = vpop.f32.mrf.mxu0
        %v2323 = vadd.f32 0.0, %v2322
        %2324 = vmatmul.f32.gmra.mxu0 %v407
        %v2325 = vpop.f32.mrf.mxu0
        %v2326 = vadd.f32 0.0, %v2325
        %2327 = vmatmul.f32.gmra.mxu0 %v409
        %v2328 = vpop.f32.mrf.mxu0
        %v2329 = vadd.f32 0.0, %v2328
        %2330 = vmatmul.f32.gmra.mxu0 %v411
        %v2331 = vpop.f32.mrf.mxu0
        %v2332 = vadd.f32 0.0, %v2331
        %2333 = vmatmul.f32.gmra.mxu0 %v413
        %v2334 = vpop.f32.mrf.mxu0
        %v2335 = vadd.f32 0.0, %v2334
        %2336 = vmatmul.f32.gmra.mxu0 %v415
        %v2337 = vpop.f32.mrf.mxu0
        %v2338 = vadd.f32 0.0, %v2337
        %2339 = vmatmul.f32.gmra.mxu0 %v417
        %v2340 = vpop.f32.mrf.mxu0
        %v2341 = vadd.f32 0.0, %v2340
        %2342 = vmatmul.f32.gmra.mxu0 %v419
        %v2343 = vpop.f32.mrf.mxu0
        %v2344 = vadd.f32 0.0, %v2343
        %2345 = vmatmul.f32.gmra.mxu0 %v421
        %v2346 = vpop.f32.mrf.mxu0
        %v2347 = vadd.f32 0.0, %v2346
        %2348 = vmatmul.f32.gmra.mxu0 %v1380
        %v2349 = vpop.f32.mrf.mxu0
        %v2350 = vadd.f32 0.0, %v2349
        %2351 = vdwg.mxu0
        %2352 = vmatpush.msra.mxu0 0.0
        %2353 = vmatpush.msra.mxu0 0.0
        %2354 = vmatpush.msra.mxu0 0.0
        %2355 = vmatpush.msra.mxu0 0.0
        %2356 = vmatpush.msra.mxu0 0.0
        %2357 = vmatpush.msra.mxu0 0.0
        %2358 = vmatpush.msra.mxu0 0.0
        %2359 = vmatpush.msra.mxu0 0.0
        %2360 = vmatpush.msra.mxu0 0.0
        %2361 = vmatpush.msra.mxu0 0.0
        %2362 = vmatpush.msra.mxu0 0.0
        %2363 = vmatpush.msra.mxu0 0.0
        %2364 = vmatpush.msra.mxu0 0.0
        %2365 = vmatpush.msra.mxu0 0.0
        %2366 = vmatpush.msra.mxu0 %v2292
        %2367 = vmatpush.msra.mxu0 %v2290
        %2368 = vmatmul.f32.gmra.mxu0 %v397
        %v2369 = vpop.f32.mrf.mxu0
        %v2370 = vadd.f32 0.0, %v2369
        %2371 = vmatmul.f32.gmra.mxu0 %v399
        %v2372 = vpop.f32.mrf.mxu0
        %v2373 = vadd.f32 0.0, %v2372
        %2374 = vmatmul.f32.gmra.mxu0 %v401
        %v2375 = vpop.f32.mrf.mxu0
        %v2376 = vadd.f32 0.0, %v2375
        %2377 = vmatmul.f32.gmra.mxu0 %v403
        %v2378 = vpop.f32.mrf.mxu0
        %v2379 = vadd.f32 0.0, %v2378
        %2380 = vmatmul.f32.gmra.mxu0 %v405
        %v2381 = vpop.f32.mrf.mxu0
        %v2382 = vadd.f32 0.0, %v2381
        %2383 = vmatmul.f32.gmra.mxu0 %v407
        %v2384 = vpop.f32.mrf.mxu0
        %v2385 = vadd.f32 0.0, %v2384
        %2386 = vmatmul.f32.gmra.mxu0 %v409
        %v2387 = vpop.f32.mrf.mxu0
        %v2388 = vadd.f32 0.0, %v2387
        %2389 = vmatmul.f32.gmra.mxu0 %v411
        %v2390 = vpop.f32.mrf.mxu0
        %v2391 = vadd.f32 0.0, %v2390
        %2392 = vmatmul.f32.gmra.mxu0 %v413
        %v2393 = vpop.f32.mrf.mxu0
        %v2394 = vadd.f32 0.0, %v2393
        %2395 = vmatmul.f32.gmra.mxu0 %v415
        %v2396 = vpop.f32.mrf.mxu0
        %v2397 = vadd.f32 0.0, %v2396
        %2398 = vmatmul.f32.gmra.mxu0 %v417
        %v2399 = vpop.f32.mrf.mxu0
        %v2400 = vadd.f32 0.0, %v2399
        %2401 = vmatmul.f32.gmra.mxu0 %v419
        %v2402 = vpop.f32.mrf.mxu0
        %v2403 = vadd.f32 0.0, %v2402
        %2404 = vmatmul.f32.gmra.mxu0 %v421
        %v2405 = vpop.f32.mrf.mxu0
        %v2406 = vadd.f32 0.0, %v2405
        %2407 = vmatmul.f32.gmra.mxu0 %v1380
        %v2408 = vpop.f32.mrf.mxu0
        %v2409 = vadd.f32 0.0, %v2408
        %2410 = vdwg.mxu0
        %v2411 = vadd.f32 %v2260, %v2311
        %v2412 = vadd.f32 %v2261, %v2370
        %v2413 = vadd.f32 %v2262, %v2314
        %v2414 = vadd.f32 %v2263, %v2373
        %v2415 = vadd.f32 %v2264, %v2317
        %v2416 = vadd.f32 %v2265, %v2376
        %v2417 = vadd.f32 %v2266, %v2320
        %v2418 = vadd.f32 %v2267, %v2379
        %v2419 = vadd.f32 %v2268, %v2323
        %v2420 = vadd.f32 %v2269, %v2382
        %v2421 = vadd.f32 %v2270, %v2326
        %v2422 = vadd.f32 %v2271, %v2385
        %v2423 = vadd.f32 %v2272, %v2329
        %v2424 = vadd.f32 %v2273, %v2388
        %v2425 = vadd.f32 %v2274, %v2332
        %v2426 = vadd.f32 %v2275, %v2391
        %v2427 = vadd.f32 %v2276, %v2335
        %v2428 = vadd.f32 %v2277, %v2394
        %v2429 = vadd.f32 %v2278, %v2338
        %v2430 = vadd.f32 %v2279, %v2397
        %v2431 = vadd.f32 %v2280, %v2341
        %v2432 = vadd.f32 %v2281, %v2400
        %v2433 = vadd.f32 %v2282, %v2344
        %v2434 = vadd.f32 %v2283, %v2403
        %v2435 = vadd.f32 %v2284, %v2347
        %v2436 = vadd.f32 %v2285, %v2406
        %v2437 = vadd.f32 %v2286, %v2350
        %v2438 = vadd.f32 %v2287, %v2409
        %s2439 = scalar_lea.vmem %s5, 128
        %v2440 = vld [vmem:[%s2439] sm:$0xff]
        %v2441 = vld [vmem:[%s2439 + $0x8] sm:$0xff]
        %v2442 = vld [vmem:[%s2439 + $0x10] sm:$0xff]
        %v2443 = vld [vmem:[%s2439 + $0x18] sm:$0xff]
        %2444 = vmatpush.msra.mxu0 0.0
        %2445 = vmatpush.msra.mxu0 0.0
        %2446 = vmatpush.msra.mxu0 0.0
        %2447 = vmatpush.msra.mxu0 0.0
        %2448 = vmatpush.msra.mxu0 0.0
        %2449 = vmatpush.msra.mxu0 0.0
        %2450 = vmatpush.msra.mxu0 0.0
        %2451 = vmatpush.msra.mxu0 0.0
        %2452 = vmatpush.msra.mxu0 0.0
        %2453 = vmatpush.msra.mxu0 0.0
        %2454 = vmatpush.msra.mxu0 0.0
        %2455 = vmatpush.msra.mxu0 0.0
        %2456 = vmatpush.msra.mxu0 0.0
        %2457 = vmatpush.msra.mxu0 0.0
        %2458 = vmatpush.msra.mxu0 %v2442
        %2459 = vmatpush.msra.mxu0 %v2440
        %2460 = vmatmul.f32.gmra.mxu0 %v734
        %v2461 = vpop.f32.mrf.mxu0
        %v2462 = vadd.f32 0.0, %v2461
        %2463 = vmatmul.f32.gmra.mxu0 %v736
        %v2464 = vpop.f32.mrf.mxu0
        %v2465 = vadd.f32 0.0, %v2464
        %2466 = vmatmul.f32.gmra.mxu0 %v738
        %v2467 = vpop.f32.mrf.mxu0
        %v2468 = vadd.f32 0.0, %v2467
        %2469 = vmatmul.f32.gmra.mxu0 %v740
        %v2470 = vpop.f32.mrf.mxu0
        %v2471 = vadd.f32 0.0, %v2470
        %2472 = vmatmul.f32.gmra.mxu0 %v742
        %v2473 = vpop.f32.mrf.mxu0
        %v2474 = vadd.f32 0.0, %v2473
        %2475 = vmatmul.f32.gmra.mxu0 %v744
        %v2476 = vpop.f32.mrf.mxu0
        %v2477 = vadd.f32 0.0, %v2476
        %2478 = vmatmul.f32.gmra.mxu0 %v746
        %v2479 = vpop.f32.mrf.mxu0
        %v2480 = vadd.f32 0.0, %v2479
        %2481 = vmatmul.f32.gmra.mxu0 %v748
        %v2482 = vpop.f32.mrf.mxu0
        %v2483 = vadd.f32 0.0, %v2482
        %2484 = vmatmul.f32.gmra.mxu0 %v750
        %v2485 = vpop.f32.mrf.mxu0
        %v2486 = vadd.f32 0.0, %v2485
        %2487 = vmatmul.f32.gmra.mxu0 %v752
        %v2488 = vpop.f32.mrf.mxu0
        %v2489 = vadd.f32 0.0, %v2488
        %2490 = vmatmul.f32.gmra.mxu0 %v754
        %v2491 = vpop.f32.mrf.mxu0
        %v2492 = vadd.f32 0.0, %v2491
        %2493 = vmatmul.f32.gmra.mxu0 %v756
        %v2494 = vpop.f32.mrf.mxu0
        %v2495 = vadd.f32 0.0, %v2494
        %2496 = vmatmul.f32.gmra.mxu0 %v758
        %v2497 = vpop.f32.mrf.mxu0
        %v2498 = vadd.f32 0.0, %v2497
        %2499 = vmatmul.f32.gmra.mxu0 %v1533
        %v2500 = vpop.f32.mrf.mxu0
        %v2501 = vadd.f32 0.0, %v2500
        %2502 = vdwg.mxu0
        %2503 = vmatpush.msra.mxu0 0.0
        %2504 = vmatpush.msra.mxu0 0.0
        %2505 = vmatpush.msra.mxu0 0.0
        %2506 = vmatpush.msra.mxu0 0.0
        %2507 = vmatpush.msra.mxu0 0.0
        %2508 = vmatpush.msra.mxu0 0.0
        %2509 = vmatpush.msra.mxu0 0.0
        %2510 = vmatpush.msra.mxu0 0.0
        %2511 = vmatpush.msra.mxu0 0.0
        %2512 = vmatpush.msra.mxu0 0.0
        %2513 = vmatpush.msra.mxu0 0.0
        %2514 = vmatpush.msra.mxu0 0.0
        %2515 = vmatpush.msra.mxu0 0.0
        %2516 = vmatpush.msra.mxu0 0.0
        %2517 = vmatpush.msra.mxu0 %v2443
        %2518 = vmatpush.msra.mxu0 %v2441
        %2519 = vmatmul.f32.gmra.mxu0 %v734
        %v2520 = vpop.f32.mrf.mxu0
        %v2521 = vadd.f32 0.0, %v2520
        %2522 = vmatmul.f32.gmra.mxu0 %v736
        %v2523 = vpop.f32.mrf.mxu0
        %v2524 = vadd.f32 0.0, %v2523
        %2525 = vmatmul.f32.gmra.mxu0 %v738
        %v2526 = vpop.f32.mrf.mxu0
        %v2527 = vadd.f32 0.0, %v2526
        %2528 = vmatmul.f32.gmra.mxu0 %v740
        %v2529 = vpop.f32.mrf.mxu0
        %v2530 = vadd.f32 0.0, %v2529
        %2531 = vmatmul.f32.gmra.mxu0 %v742
        %v2532 = vpop.f32.mrf.mxu0
        %v2533 = vadd.f32 0.0, %v2532
        %2534 = vmatmul.f32.gmra.mxu0 %v744
        %v2535 = vpop.f32.mrf.mxu0
        %v2536 = vadd.f32 0.0, %v2535
        %2537 = vmatmul.f32.gmra.mxu0 %v746
        %v2538 = vpop.f32.mrf.mxu0
        %v2539 = vadd.f32 0.0, %v2538
        %2540 = vmatmul.f32.gmra.mxu0 %v748
        %v2541 = vpop.f32.mrf.mxu0
        %v2542 = vadd.f32 0.0, %v2541
        %2543 = vmatmul.f32.gmra.mxu0 %v750
        %v2544 = vpop.f32.mrf.mxu0
        %v2545 = vadd.f32 0.0, %v2544
        %2546 = vmatmul.f32.gmra.mxu0 %v752
        %v2547 = vpop.f32.mrf.mxu0
        %v2548 = vadd.f32 0.0, %v2547
        %2549 = vmatmul.f32.gmra.mxu0 %v754
        %v2550 = vpop.f32.mrf.mxu0
        %v2551 = vadd.f32 0.0, %v2550
        %2552 = vmatmul.f32.gmra.mxu0 %v756
        %v2553 = vpop.f32.mrf.mxu0
        %v2554 = vadd.f32 0.0, %v2553
        %2555 = vmatmul.f32.gmra.mxu0 %v758
        %v2556 = vpop.f32.mrf.mxu0
        %v2557 = vadd.f32 0.0, %v2556
        %2558 = vmatmul.f32.gmra.mxu0 %v1533
        %v2559 = vpop.f32.mrf.mxu0
        %v2560 = vadd.f32 0.0, %v2559
        %2561 = vdwg.mxu0
        %v2562 = vadd.f32 %v2411, %v2462
        %v2563 = vadd.f32 %v2412, %v2521
        %v2564 = vadd.f32 %v2413, %v2465
        %v2565 = vadd.f32 %v2414, %v2524
        %v2566 = vadd.f32 %v2415, %v2468
        %v2567 = vadd.f32 %v2416, %v2527
        %v2568 = vadd.f32 %v2417, %v2471
        %v2569 = vadd.f32 %v2418, %v2530
        %v2570 = vadd.f32 %v2419, %v2474
        %v2571 = vadd.f32 %v2420, %v2533
        %v2572 = vadd.f32 %v2421, %v2477
        %v2573 = vadd.f32 %v2422, %v2536
        %v2574 = vadd.f32 %v2423, %v2480
        %v2575 = vadd.f32 %v2424, %v2539
        %v2576 = vadd.f32 %v2425, %v2483
        %v2577 = vadd.f32 %v2426, %v2542
        %v2578 = vadd.f32 %v2427, %v2486
        %v2579 = vadd.f32 %v2428, %v2545
        %v2580 = vadd.f32 %v2429, %v2489
        %v2581 = vadd.f32 %v2430, %v2548
        %v2582 = vadd.f32 %v2431, %v2492
        %v2583 = vadd.f32 %v2432, %v2551
        %v2584 = vadd.f32 %v2433, %v2495
        %v2585 = vadd.f32 %v2434, %v2554
        %v2586 = vadd.f32 %v2435, %v2498
        %v2587 = vadd.f32 %v2436, %v2557
        %v2588 = vadd.f32 %v2437, %v2501
        %v2589 = vadd.f32 %v2438, %v2560
        %v2590 = vld [vmem:[%s6] sm:$0x3]
        %v2592 = vperm.slane %v2590, 0
        %v2593 = vperm.slane %v2590, 1
        %v2596 = vadd.f32 %v2562, %v2592
        %v2597 = vadd.f32 %v2563, %v2593
        %v2598 = vadd.f32 %v2564, %v2592
        %v2599 = vadd.f32 %v2565, %v2593
        %v2600 = vadd.f32 %v2566, %v2592
        %v2601 = vadd.f32 %v2567, %v2593
        %v2602 = vadd.f32 %v2568, %v2592
        %v2603 = vadd.f32 %v2569, %v2593
        %v2604 = vadd.f32 %v2570, %v2592
        %v2605 = vadd.f32 %v2571, %v2593
        %v2606 = vadd.f32 %v2572, %v2592
        %v2607 = vadd.f32 %v2573, %v2593
        %v2608 = vadd.f32 %v2574, %v2592
        %v2609 = vadd.f32 %v2575, %v2593
        %v2610 = vadd.f32 %v2576, %v2592
        %v2611 = vadd.f32 %v2577, %v2593
        %v2612 = vadd.f32 %v2578, %v2592
        %v2613 = vadd.f32 %v2579, %v2593
        %v2614 = vadd.f32 %v2580, %v2592
        %v2615 = vadd.f32 %v2581, %v2593
        %v2616 = vadd.f32 %v2582, %v2592
        %v2617 = vadd.f32 %v2583, %v2593
        %v2618 = vadd.f32 %v2584, %v2592
        %v2619 = vadd.f32 %v2585, %v2593
        %v2620 = vadd.f32 %v2586, %v2592
        %v2621 = vadd.f32 %v2587, %v2593
        %v2622 = vadd.f32 %v2588, %v2592
        %v2623 = vadd.f32 %v2589, %v2593
        %v2624 = vmax.f32 %v2596, 0.0
        %v2625 = vmax.f32 %v2597, 0.0
        %v2626 = vmax.f32 %v2598, 0.0
        %v2627 = vmax.f32 %v2599, 0.0
        %v2628 = vmax.f32 %v2600, 0.0
        %v2629 = vmax.f32 %v2601, 0.0
        %v2630 = vmax.f32 %v2602, 0.0
        %v2631 = vmax.f32 %v2603, 0.0
        %v2632 = vmax.f32 %v2604, 0.0
        %v2633 = vmax.f32 %v2605, 0.0
        %v2634 = vmax.f32 %v2606, 0.0
        %v2635 = vmax.f32 %v2607, 0.0
        %v2636 = vmax.f32 %v2608, 0.0
        %v2637 = vmax.f32 %v2609, 0.0
        %v2638 = vmax.f32 %v2610, 0.0
        %v2639 = vmax.f32 %v2611, 0.0
        %v2640 = vmax.f32 %v2612, 0.0
        %v2641 = vmax.f32 %v2613, 0.0
        %v2642 = vmax.f32 %v2614, 0.0
        %v2643 = vmax.f32 %v2615, 0.0
        %v2644 = vmax.f32 %v2616, 0.0
        %v2645 = vmax.f32 %v2617, 0.0
        %v2646 = vmax.f32 %v2618, 0.0
        %v2647 = vmax.f32 %v2619, 0.0
        %v2648 = vmax.f32 %v2620, 0.0
        %v2649 = vmax.f32 %v2621, 0.0
        %v2650 = vmax.f32 %v2622, 0.0
        %v2651 = vmax.f32 %v2623, 0.0
        %v2652 = vmax.f32 %v2624, %v2628
        %v2653 = vmax.f32 %v2626, %v2630
        %v2654 = vmax.f32 %v2652, %v2632
        %v2655 = vmax.f32 %v2653, %v2634
        %v2656 = vmax.f32 %v2654, %v2636
        %v2657 = vmax.f32 %v2655, %v2638
        %v2658 = vmax.f32 %v2656, %v2640
        %v2659 = vmax.f32 %v2657, %v2642
        %v2660 = vmax.f32 %v2658, %v2644
        %v2661 = vmax.f32 %v2659, %v2646
        %v2662 = vmax.f32 %v2660, %v2648
        %vm2663 = vcmask 1041408
        %v2664 = vsel %vm2663, %v2650, -inf
        %v2665 = vmax.f32 %v2661, %v2664
        %v2666 = vmax.f32 %v2662, %v2665
        %v2667 = vrot.slane %v2666, 4
        %v2668 = vmax.f32 %v2666, %v2667
        %v2669 = vrot.slane %v2668, 2
        %v2670 = vmax.f32 %v2668, %v2669
        %v2671 = vrot.slane %v2670, 1
        %v2672 = vmax.f32 %v2670, %v2671
        %v2673 = vsel %vm974, %v2625, -inf
        %v2674 = vsel %vm974, %v2627, -inf
        %v2675 = vsel %vm974, %v2629, -inf
        %v2676 = vmax.f32 %v2673, %v2675
        %v2677 = vsel %vm974, %v2631, -inf
        %v2678 = vmax.f32 %v2674, %v2677
        %v2679 = vsel %vm974, %v2633, -inf
        %v2680 = vmax.f32 %v2676, %v2679
        %v2681 = vsel %vm974, %v2635, -inf
        %v2682 = vmax.f32 %v2678, %v2681
        %v2683 = vsel %vm974, %v2637, -inf
        %v2684 = vmax.f32 %v2680, %v2683
        %v2685 = vsel %vm974, %v2639, -inf
        %v2686 = vmax.f32 %v2682, %v2685
        %v2687 = vsel %vm974, %v2641, -inf
        %v2688 = vmax.f32 %v2684, %v2687
        %v2689 = vsel %vm974, %v2643, -inf
        %v2690 = vmax.f32 %v2686, %v2689
        %v2691 = vsel %vm974, %v2645, -inf
        %v2692 = vmax.f32 %v2688, %v2691
        %v2693 = vsel %vm974, %v2647, -inf
        %v2694 = vmax.f32 %v2690, %v2693
        %v2695 = vsel %vm974, %v2649, -inf
        %v2696 = vmax.f32 %v2692, %v2695
        %vm2697 = vcmask 173056
        %v2698 = vsel %vm2697, %v2651, -inf
        %v2699 = vmax.f32 %v2694, %v2698
        %v2700 = vmax.f32 %v2696, %v2699
        %v2701 = vrot.slane %v2700, 4
        %v2702 = vmax.f32 %v2700, %v2701
        %v2703 = vrot.slane %v2702, 2
        %v2704 = vmax.f32 %v2702, %v2703
        %v2705 = vrot.slane %v2704, 1
        %v2706 = vmax.f32 %v2704, %v2705
        %v2707 = vld [vmem:[%s7 + $0x12c] sm:$0xff]
        %v2708 = vld [vmem:[%s7 + $0x134] sm:$0xff]
        %v2709 = vld [vmem:[%s7 + $0x13c] sm:$0xff]
        %v2710 = vld [vmem:[%s7 + $0x144] sm:$0xff]
        %v2711 = vld [vmem:[%s7 + $0x14c] sm:$0xff]
        %v2712 = vld [vmem:[%s7 + $0x154] sm:$0xff]
        %v2713 = vld [vmem:[%s7 + $0x15c] sm:$0xff]
        %v2714 = vld [vmem:[%s7 + $0x164] sm:$0xff]
        %v2715 = vld [vmem:[%s7 + $0x16c] sm:$0xff]
        %v2716 = vld [vmem:[%s7 + $0x174] sm:$0xff]
        %v2717 = vld [vmem:[%s7 + $0x17c] sm:$0xff]
        %v2718 = vld [vmem:[%s7 + $0x184] sm:$0xff]
        %v2719 = vld [vmem:[%s7 + $0x18c] sm:$0xff]
        %v2720 = vld [vmem:[%s7 + $0x194] sm:$0xff]
        %v2721 = vld [vmem:[%s7 + $0x19c] sm:$0xff]
        %v2722 = vld [vmem:[%s7 + $0x1a4] sm:$0xff]
        %v2723 = vld [vmem:[%s7 + $0x1ac] sm:$0xff]
        %v2724 = vld [vmem:[%s7 + $0x1b4] sm:$0xff]
        %v2725 = vld [vmem:[%s7 + $0x1bc] sm:$0x3f]
        %v2727 = vsel %vm974, %v2706, 0
        %v2730 = vsel %vm535, %v2725, 0
        %2732 = vmatpush.msra.mxu0 %v2722
        %2733 = vmatpush.msra.mxu0 %v2721
        %2734 = vmatpush.msra.mxu0 %v2720
        %2735 = vmatpush.msra.mxu0 %v2719
        %2736 = vmatpush.msra.mxu0 %v2718
        %2737 = vmatpush.msra.mxu0 %v2717
        %2738 = vmatpush.msra.mxu0 %v2716
        %2739 = vmatpush.msra.mxu0 %v2715
        %2740 = vmatpush.msra.mxu0 %v2714
        %2741 = vmatpush.msra.mxu0 %v2713
        %2742 = vmatpush.msra.mxu0 %v2712
        %2743 = vmatpush.msra.mxu0 %v2711
        %2744 = vmatpush.msra.mxu0 %v2710
        %2745 = vmatpush.msra.mxu0 %v2709
        %2746 = vmatpush.msra.mxu0 %v2708
        %2747 = vmatpush.msra.mxu0 %v2707
        %2748 = vmatmul.f32.gmra.mxu0 %v2672
        %v2749 = vpop.f32.mrf.mxu0
        %v2750 = vadd.f32 0.0, %v2749
        %2751 = vdwg.mxu0
        %2752 = vmatpush.msra.mxu0 0.0
        %2753 = vmatpush.msra.mxu0 0.0
        %2754 = vmatpush.msra.mxu0 0.0
        %2755 = vmatpush.msra.mxu0 0.0
        %2756 = vmatpush.msra.mxu0 0.0
        %2757 = vmatpush.msra.mxu0 0.0
        %2758 = vmatpush.msra.mxu0 0.0
        %2759 = vmatpush.msra.mxu0 0.0
        %2760 = vmatpush.msra.mxu0 0.0
        %2761 = vmatpush.msra.mxu0 0.0
        %2762 = vmatpush.msra.mxu0 0.0
        %2763 = vmatpush.msra.mxu0 0.0
        %2764 = vmatpush.msra.mxu0 0.0
        %2765 = vmatpush.msra.mxu0 %v2730
        %2766 = vmatpush.msra.mxu0 %v2724
        %2767 = vmatpush.msra.mxu0 %v2723
        %2768 = vmatmul.f32.gmra.mxu0 %v2727
        %v2769 = vpop.f32.mrf.mxu0
        %v2770 = vadd.f32 %v2750, %v2769
        %2771 = vdwg.mxu0
        %v2772 = vadd.f32 %v1863, %v2770
        %vm2773 = vcmask 811008
        %2774 = vst.msk [vmem:[%s324] sm:$0x1] %vm2773, %v2772
        %s2775 = sand.u32 %s225, 1
        %s2776 = scalar_lea.sflag [#allocation3], %s2775
        %s2777 = sand.u32 %s225, 1
        %s2778 = scalar_lea.vmem [#allocation2], %s2777
        // Predicated region
        $region57: #{tpu_custom_call.1} parent=55 // pred_check
          %p2779 = pneg %p235
        $region58: #{tpu_custom_call.1} parent=55 // pred_check_branch
          %2781 = sbr.rel (%p2779) target = $region60
        $region59: #{tpu_custom_call.1} parent=55 // pred_region
          %2783 = vsyncadd %s2776, 0
          %s2784 = scalar_lea.hbm %s9, %s23
          %s2786 = sshll.u32 %s2778, 4
          %s2787 = int_to_ptr.vmem [resolvable:$true] %s2786
          %s2788 = sshll.u32 %s2784, 4
          %s2789 = int_to_ptr.hbm [resolvable:$true] %s2788
          %2791 = dma.vmem_to_hbm [thread:$0]  %s2787, 16, %s2789, %s2776
        $region60: #{tpu_custom_call.1} parent=55 // pred_fallthru
          _
      $region56: #{tpu_custom_call.1} parent=5 // pred_fallthru
        _
      %p2792 = scmp.le.s32.totalorder 2, %s18
      // Predicated region
      $region61: #{tpu_custom_call.1} parent=5 // pred_check
        %p2793 = pneg %p2792
      $region62: #{tpu_custom_call.1} parent=5 // pred_check_branch
        %2795 = sbr.rel (%p2793) target = $region64
      $region63: #{tpu_custom_call.1} parent=5 // pred_region
        %s2796 = ssub.s32 %s18, 2
        // Predicated region
        $region65: #{tpu_custom_call.1} parent=63 // pred_check
          %p2797 = pneg %p241
        $region66: #{tpu_custom_call.1} parent=63 // pred_check_branch
          %2799 = sbr.rel (%p2797) target = $region68
        $region67: #{tpu_custom_call.1} parent=63 // pred_region
          %s2800 = sand.u32 %s226, 1
          %s2801 = scalar_lea.sflag [#allocation3], %s2800
          %s2802 = sand.u32 %s226, 1
          %s2803 = scalar_lea.vmem [#allocation2], %s2802
          %2805 = dma.done %s2801, 16
        $region68: #{tpu_custom_call.1} parent=63 // pred_fallthru
          _
      $region64: #{tpu_custom_call.1} parent=5 // pred_fallthru
        _
    $region6: #{tpu_custom_call.1} parent=1 // loop_footer
      %s22 = sadd.s32 1, %s18
    $region7: #{tpu_custom_call.1} parent=1 // loop_footer_branch
      %17 = sbr.rel target = $region3
    $region8: #{tpu_custom_call.1} parent=1 // loop_exit
      _
    %2806 = vsyncpa [#allocation3], 1
    %s2807 = scalar_lea.sflag [#allocation3], 1
    %2808 = vsyncpa %s2807, 1

</llo_original>
